<compile_context>
chip_gen: v7x
topology: tpu7x:2x2x1
jax: 0.10.0
libtpu: 0.0.40
codegen_flags: <defaults>
</compile_context>

<pallas_src>
import jax
import jax.numpy as jnp
from jax import lax
from jax.experimental import pallas as pl
from jax.experimental.pallas import tpu as pltpu


def lstm_mlp_kernel(x_ref, w_ih_t_ref, w_hh_t_ref, b_ref,
                    w1_ref, b1_ref, w23_ref, b23_ref, out_ref, xp_ref):
    SB, _ = x_ref.shape                    # (S*Bp, F) time-major slab
    H = w_hh_t_ref.shape[0]
    Bp = out_ref.shape[0]
    S = SB // Bp

    # Hoist weight loads out of the timestep loop.
    w_hh_t = w_hh_t_ref[...]               # (H, 4H)

    # Input projection + fused bias for ALL timesteps in one pipelined MXU matmul
    # (no recurrent dependency -> off the serial critical path).
    xp_ref[...] = (jnp.dot(x_ref[...], w_ih_t_ref[...],
                           preferred_element_type=jnp.float32)
                   + b_ref[...])           # (S*Bp, 4H)

    # Lane mask selecting the 'g' gate lanes (PyTorch gate order: i, f, g, o).
    lane = lax.broadcasted_iota(jnp.int32, (Bp, 4 * H), 1)
    g_lanes = (lane >= 2 * H) & (lane < 3 * H)

    def step(t, carry):
        h, c = carry
        start = pl.multiple_of(t * Bp, 8)               # Bp is a multiple of 8
        gates = (xp_ref[pl.ds(start, Bp), :]
                 + jnp.dot(h, w_hh_t, preferred_element_type=jnp.float32))  # (Bp, 4H)
        # One full-width EUP tanh; sigmoid via identity sigmoid(x)=0.5*(1+tanh(x/2)).
        pre = jnp.where(g_lanes, gates, 0.5 * gates)
        th = jnp.tanh(pre)
        act = jnp.where(g_lanes, th, 0.5 * th + 0.5)
        i = act[:, 0 * H:1 * H]
        f = act[:, 1 * H:2 * H]
        g = act[:, 2 * H:3 * H]
        o = act[:, 3 * H:4 * H]
        c_new = f * c + i * g
        h_new = o * jnp.tanh(c_new)
        return (h_new, c_new)

    h0 = jnp.zeros((Bp, H), jnp.float32)
    c0 = jnp.zeros((Bp, H), jnp.float32)
    # Full unroll only while S is small; cap it for long sequences (spill regime).
    unroll = True if S <= 32 else 8
    h, _ = lax.fori_loop(0, S, step, (h0, c0), unroll=unroll)

    # MLP head on the final hidden state hn[0].
    out = jnp.maximum(h, 0.0)                                                     # relu(hn[0])
    out = jnp.dot(out, w1_ref[...], preferred_element_type=jnp.float32) + b1_ref[...]
    out = jnp.maximum(out, 0.0)                                                   # relu
    out = jnp.dot(out, w23_ref[...], preferred_element_type=jnp.float32) + b23_ref[...]
    out_ref[...] = out.astype(out_ref.dtype)                                      # (Bp, 1)


def shallow_regression_lstm(x, params):
    """x: (B, S, F) batch_first, float32.  Returns (B,) like .flatten()."""
    B, S, F = x.shape
    H = params["w_hh"].shape[1]

    # Pad batch to a full sublane group (multiple of 8, min 8).
    Bp = max(8, ((B + 7) // 8) * 8)

    x_tm = jnp.transpose(x, (1, 0, 2))                        # (S, B, F) time-major
    if Bp != B:
        x_tm = jnp.pad(x_tm, ((0, 0), (0, Bp - B), (0, 0)))   # zero rows -> discarded
    x2d = x_tm.reshape(S * Bp, F)                             # (S*Bp, F) 2-D slab

    w_ih_t = params["w_ih"].T                                 # (F, 4H)
    w_hh_t = params["w_hh"].T                                 # (H, 4H)
    b = (params["b_ih"] + params["b_hh"]).reshape(1, 4 * H)   # (1, 4H)
    w1_t = params["fc1_w"].T                                  # (H, 32)
    b1 = params["fc1_b"].reshape(1, 32)
    # Fold fc(32->16) and linear(16->1): no nonlinearity between them.
    w23 = params["fc_w"].T @ params["lin_w"].T                # (32, 1)
    b23 = (params["fc_b"].reshape(1, 16) @ params["lin_w"].T
           + params["lin_b"].reshape(1, 1))                   # (1, 1)

    vmem = lambda: pl.BlockSpec(memory_space=pltpu.MemorySpace.VMEM)

    out = pl.pallas_call(
        lstm_mlp_kernel,
        out_shape=jax.ShapeDtypeStruct((Bp, 1), jnp.float32),
        in_specs=[vmem() for _ in range(8)],
        out_specs=vmem(),
        scratch_shapes=[pltpu.VMEM((S * Bp, 4 * H), jnp.float32)],   # hoisted x-projection
        compiler_params=pltpu.CompilerParams(vmem_limit_bytes=32 * 1024 * 1024),
    )(x2d, w_ih_t, w_hh_t, b, w1_t, b1, w23, b23)

    return out[:B, 0]


def init_params(key, num_features, hidden_units):
    """Deterministic uniform(-1/sqrt(H), 1/sqrt(H)) init, PyTorch-style shapes."""
    H = hidden_units
    k = 1.0 / jnp.sqrt(jnp.float32(H))
    keys = jax.random.split(key, 10)
    u = lambda kk, shape, bnd: jax.random.uniform(kk, shape, jnp.float32, -bnd, bnd)
    return {
        "w_ih": u(keys[0], (4 * H, num_features), k),
        "w_hh": u(keys[1], (4 * H, H), k),
        "b_ih": u(keys[2], (4 * H,), k),
        "b_hh": u(keys[3], (4 * H,), k),
        "fc1_w": u(keys[4], (32, H), 1.0 / jnp.sqrt(jnp.float32(H))),
        "fc1_b": u(keys[5], (32,), 1.0 / jnp.sqrt(jnp.float32(H))),
        "fc_w": u(keys[6], (16, 32), 1.0 / jnp.sqrt(32.0)),
        "fc_b": u(keys[7], (16,), 1.0 / jnp.sqrt(32.0)),
        "lin_w": u(keys[8], (1, 16), 1.0 / jnp.sqrt(16.0)),
        "lin_b": u(keys[9], (1,), 1.0 / jnp.sqrt(16.0)),
    }


def reference_forward(x, params):
    """Pure-JAX reference mirroring the PyTorch forward (eval-mode, dropout inert)."""
    B, S, F = x.shape
    H = params["w_hh"].shape[1]
    h = jnp.zeros((B, H), jnp.float32)
    c = jnp.zeros((B, H), jnp.float32)
    b = params["b_ih"] + params["b_hh"]
    for t in range(S):
        gates = x[:, t, :] @ params["w_ih"].T + h @ params["w_hh"].T + b
        i = jax.nn.sigmoid(gates[:, 0 * H:1 * H])
        f = jax.nn.sigmoid(gates[:, 1 * H:2 * H])
        g = jnp.tanh(gates[:, 2 * H:3 * H])
        o = jax.nn.sigmoid(gates[:, 3 * H:4 * H])
        c = f * c + i * g
        h = o * jnp.tanh(c)
    out = jnp.maximum(h, 0.0)
    out = jnp.maximum(out @ params["fc1_w"].T + params["fc1_b"], 0.0)
    out = out @ params["fc_w"].T + params["fc_b"]
    out = out @ params["lin_w"].T + params["lin_b"]
    return out.reshape(-1)


if __name__ == "__main__":
    B, S, F, H = 2, 8, 4, 32
    key = jax.random.PRNGKey(0)
    kx, kp = jax.random.split(key)
    x = jax.random.normal(kx, (B, S, F), jnp.float32)
    params = init_params(kp, F, H)

    out = shallow_regression_lstm(x, params)
    out = jax.block_until_ready(out)

    ref = reference_forward(x, params)
    assert out.shape == (B,)
    assert jnp.allclose(out, ref, atol=1e-4, rtol=1e-4), (out, ref)

    print("KERNEL_OK")
</pallas_src>

<mosaic_0001>
module attributes {stable_mosaic.version = 11 : i64} {
  func.func @lstm_mlp_kernel(%arg0: memref<64x4xf32, #tpu.memory_space<vmem>>, %arg1: memref<4x128xf32, #tpu.memory_space<vmem>>, %arg2: memref<32x128xf32, #tpu.memory_space<vmem>>, %arg3: memref<1x128xf32, #tpu.memory_space<vmem>>, %arg4: memref<32x32xf32, #tpu.memory_space<vmem>>, %arg5: memref<1x32xf32, #tpu.memory_space<vmem>>, %arg6: memref<32x1xf32, #tpu.memory_space<vmem>>, %arg7: memref<1x1xf32, #tpu.memory_space<vmem>>, %arg8: memref<8x1xf32, #tpu.memory_space<vmem>>, %arg9: memref<64x128xf32, #tpu.memory_space<vmem>>) attributes {dimension_semantics = [], scalar_prefetch = 0 : i64, scratch_operands = 1 : i64, tpu.core_type = #tpu.core_type<tc>} {
    %c0 = arith.constant 0 : index
    %c0_0 = arith.constant 0 : index
    %0 = vector.load %arg2[%c0, %c0_0] : memref<32x128xf32, #tpu.memory_space<vmem>>, vector<32x128xf32>
    %c0_1 = arith.constant 0 : index
    %c0_2 = arith.constant 0 : index
    %1 = vector.load %arg0[%c0_1, %c0_2] : memref<64x4xf32, #tpu.memory_space<vmem>>, vector<64x4xf32>
    %c0_3 = arith.constant 0 : index
    %c0_4 = arith.constant 0 : index
    %2 = vector.load %arg1[%c0_3, %c0_4] : memref<4x128xf32, #tpu.memory_space<vmem>>, vector<4x128xf32>
    %cst = arith.constant dense<0.000000e+00> : vector<64x128xf32>
    %3 = tpu.matmul %1, %2, %cst {dimension_numbers = #tpu.dot_dimension_numbers<[1], [0], [0], [1], [0, 0, 1, 1], [], []>} : vector<64x4xf32>, vector<4x128xf32>, vector<64x128xf32> -> vector<64x128xf32>
    %c0_5 = arith.constant 0 : index
    %c0_6 = arith.constant 0 : index
    %4 = vector.load %arg3[%c0_5, %c0_6] : memref<1x128xf32, #tpu.memory_space<vmem>>, vector<1x128xf32>
    %5 = vector.broadcast %4 : vector<1x128xf32> to vector<64x128xf32>
    %6 = arith.addf %3, %5 : vector<64x128xf32>
    %c0_7 = arith.constant 0 : index
    %c0_8 = arith.constant 0 : index
    %7 = vector.load %arg9[%c0_7, %c0_8] : memref<64x128xf32, #tpu.memory_space<vmem>>, vector<64x128xf32>
    tpu.vector_store %arg9[%c0_7, %c0_8], %6 {strides = array<i32>} : memref<64x128xf32, #tpu.memory_space<vmem>>, vector<64x128xf32>,
    %8 = tpu.iota {dimensions = array<i32: 1>} : vector<8x128xi32>
    %c64_i32 = arith.constant 64 : i32
    %9 = vector.broadcast %c64_i32 : i32 to vector<8x128xi32>
    %10 = arith.cmpi sge, %8, %9 : vector<8x128xi32>
    %c96_i32 = arith.constant 96 : i32
    %11 = vector.broadcast %c96_i32 : i32 to vector<8x128xi32>
    %12 = arith.cmpi slt, %8, %11 : vector<8x128xi32>
    %13 = arith.andi %10, %12 : vector<8x128xi1>
    %cst_9 = arith.constant 0.000000e+00 : f32
    %14 = vector.broadcast %cst_9 : f32 to vector<8x32xf32>
    %cst_10 = arith.constant 0.000000e+00 : f32
    %15 = vector.broadcast %cst_10 : f32 to vector<8x32xf32>
    %c0_i32 = arith.constant 0 : i32
    %c8_i32 = arith.constant 8 : i32
    %16 = arith.muli %c0_i32, %c8_i32 : i32
    %17 = tpu.assume_multiple %16, 8 : i32
    %18 = arith.index_cast %17 : i32 to index
    %c0_11 = arith.constant 0 : index
    %19 = vector.load %arg9[%18, %c0_11] : memref<64x128xf32, #tpu.memory_space<vmem>>, vector<8x128xf32>
    %cst_12 = arith.constant dense<0.000000e+00> : vector<8x128xf32>
    %20 = tpu.matmul %14, %0, %cst_12 {dimension_numbers = #tpu.dot_dimension_numbers<[1], [0], [0], [1], [0, 0, 1, 1], [], []>} : vector<8x32xf32>, vector<32x128xf32>, vector<8x128xf32> -> vector<8x128xf32>
    %21 = arith.addf %19, %20 : vector<8x128xf32>
    %cst_13 = arith.constant 5.000000e-01 : f32
    %22 = vector.broadcast %cst_13 : f32 to vector<8x128xf32>
    %23 = arith.mulf %22, %21 : vector<8x128xf32>
    %24 = arith.select %13, %21, %23 : vector<8x128xi1>, vector<8x128xf32>
    %25 = math.tanh %24 : vector<8x128xf32>
    %cst_14 = arith.constant 5.000000e-01 : f32
    %26 = vector.broadcast %cst_14 : f32 to vector<8x128xf32>
    %27 = arith.mulf %26, %25 : vector<8x128xf32>
    %cst_15 = arith.constant 5.000000e-01 : f32
    %28 = vector.broadcast %cst_15 : f32 to vector<8x128xf32>
    %29 = arith.addf %27, %28 : vector<8x128xf32>
    %30 = arith.select %13, %25, %29 : vector<8x128xi1>, vector<8x128xf32>
    %31 = vector.extract_strided_slice %30 {offsets = [0, 0], sizes = [8, 32], strides = [1, 1]} : vector<8x128xf32> to vector<8x32xf32>
    %32 = vector.extract_strided_slice %30 {offsets = [0, 32], sizes = [8, 32], strides = [1, 1]} : vector<8x128xf32> to vector<8x32xf32>
    %33 = vector.extract_strided_slice %30 {offsets = [0, 64], sizes = [8, 32], strides = [1, 1]} : vector<8x128xf32> to vector<8x32xf32>
    %34 = vector.extract_strided_slice %30 {offsets = [0, 96], sizes = [8, 32], strides = [1, 1]} : vector<8x128xf32> to vector<8x32xf32>
    %35 = arith.mulf %32, %15 : vector<8x32xf32>
    %36 = arith.mulf %31, %33 : vector<8x32xf32>
    %37 = arith.addf %35, %36 : vector<8x32xf32>
    %38 = math.tanh %37 : vector<8x32xf32>
    %39 = arith.mulf %34, %38 : vector<8x32xf32>
    %c1_i32 = arith.constant 1 : i32
    %c8_i32_16 = arith.constant 8 : i32
    %40 = arith.muli %c1_i32, %c8_i32_16 : i32
    %41 = tpu.assume_multiple %40, 8 : i32
    %42 = arith.index_cast %41 : i32 to index
    %c0_17 = arith.constant 0 : index
    %43 = vector.load %arg9[%42, %c0_17] : memref<64x128xf32, #tpu.memory_space<vmem>>, vector<8x128xf32>
    %cst_18 = arith.constant dense<0.000000e+00> : vector<8x128xf32>
    %44 = tpu.matmul %39, %0, %cst_18 {dimension_numbers = #tpu.dot_dimension_numbers<[1], [0], [0], [1], [0, 0, 1, 1], [], []>} : vector<8x32xf32>, vector<32x128xf32>, vector<8x128xf32> -> vector<8x128xf32>
    %45 = arith.addf %43, %44 : vector<8x128xf32>
    %cst_19 = arith.constant 5.000000e-01 : f32
    %46 = vector.broadcast %cst_19 : f32 to vector<8x128xf32>
    %47 = arith.mulf %46, %45 : vector<8x128xf32>
    %48 = arith.select %13, %45, %47 : vector<8x128xi1>, vector<8x128xf32>
    %49 = math.tanh %48 : vector<8x128xf32>
    %cst_20 = arith.constant 5.000000e-01 : f32
    %50 = vector.broadcast %cst_20 : f32 to vector<8x128xf32>
    %51 = arith.mulf %50, %49 : vector<8x128xf32>
    %cst_21 = arith.constant 5.000000e-01 : f32
    %52 = vector.broadcast %cst_21 : f32 to vector<8x128xf32>
    %53 = arith.addf %51, %52 : vector<8x128xf32>
    %54 = arith.select %13, %49, %53 : vector<8x128xi1>, vector<8x128xf32>
    %55 = vector.extract_strided_slice %54 {offsets = [0, 0], sizes = [8, 32], strides = [1, 1]} : vector<8x128xf32> to vector<8x32xf32>
    %56 = vector.extract_strided_slice %54 {offsets = [0, 32], sizes = [8, 32], strides = [1, 1]} : vector<8x128xf32> to vector<8x32xf32>
    %57 = vector.extract_strided_slice %54 {offsets = [0, 64], sizes = [8, 32], strides = [1, 1]} : vector<8x128xf32> to vector<8x32xf32>
    %58 = vector.extract_strided_slice %54 {offsets = [0, 96], sizes = [8, 32], strides = [1, 1]} : vector<8x128xf32> to vector<8x32xf32>
    %59 = arith.mulf %56, %37 : vector<8x32xf32>
    %60 = arith.mulf %55, %57 : vector<8x32xf32>
    %61 = arith.addf %59, %60 : vector<8x32xf32>
    %62 = math.tanh %61 : vector<8x32xf32>
    %63 = arith.mulf %58, %62 : vector<8x32xf32>
    %c2_i32 = arith.constant 2 : i32
    %c8_i32_22 = arith.constant 8 : i32
    %64 = arith.muli %c2_i32, %c8_i32_22 : i32
    %65 = tpu.assume_multiple %64, 8 : i32
    %66 = arith.index_cast %65 : i32 to index
    %c0_23 = arith.constant 0 : index
    %67 = vector.load %arg9[%66, %c0_23] : memref<64x128xf32, #tpu.memory_space<vmem>>, vector<8x128xf32>
    %cst_24 = arith.constant dense<0.000000e+00> : vector<8x128xf32>
    %68 = tpu.matmul %63, %0, %cst_24 {dimension_numbers = #tpu.dot_dimension_numbers<[1], [0], [0], [1], [0, 0, 1, 1], [], []>} : vector<8x32xf32>, vector<32x128xf32>, vector<8x128xf32> -> vector<8x128xf32>
    %69 = arith.addf %67, %68 : vector<8x128xf32>
    %cst_25 = arith.constant 5.000000e-01 : f32
    %70 = vector.broadcast %cst_25 : f32 to vector<8x128xf32>
    %71 = arith.mulf %70, %69 : vector<8x128xf32>
    %72 = arith.select %13, %69, %71 : vector<8x128xi1>, vector<8x128xf32>
    %73 = math.tanh %72 : vector<8x128xf32>
    %cst_26 = arith.constant 5.000000e-01 : f32
    %74 = vector.broadcast %cst_26 : f32 to vector<8x128xf32>
    %75 = arith.mulf %74, %73 : vector<8x128xf32>
    %cst_27 = arith.constant 5.000000e-01 : f32
    %76 = vector.broadcast %cst_27 : f32 to vector<8x128xf32>
    %77 = arith.addf %75, %76 : vector<8x128xf32>
    %78 = arith.select %13, %73, %77 : vector<8x128xi1>, vector<8x128xf32>
    %79 = vector.extract_strided_slice %78 {offsets = [0, 0], sizes = [8, 32], strides = [1, 1]} : vector<8x128xf32> to vector<8x32xf32>
    %80 = vector.extract_strided_slice %78 {offsets = [0, 32], sizes = [8, 32], strides = [1, 1]} : vector<8x128xf32> to vector<8x32xf32>
    %81 = vector.extract_strided_slice %78 {offsets = [0, 64], sizes = [8, 32], strides = [1, 1]} : vector<8x128xf32> to vector<8x32xf32>
    %82 = vector.extract_strided_slice %78 {offsets = [0, 96], sizes = [8, 32], strides = [1, 1]} : vector<8x128xf32> to vector<8x32xf32>
    %83 = arith.mulf %80, %61 : vector<8x32xf32>
    %84 = arith.mulf %79, %81 : vector<8x32xf32>
    %85 = arith.addf %83, %84 : vector<8x32xf32>
    %86 = math.tanh %85 : vector<8x32xf32>
    %87 = arith.mulf %82, %86 : vector<8x32xf32>
    %c3_i32 = arith.constant 3 : i32
    %c8_i32_28 = arith.constant 8 : i32
    %88 = arith.muli %c3_i32, %c8_i32_28 : i32
    %89 = tpu.assume_multiple %88, 8 : i32
    %90 = arith.index_cast %89 : i32 to index
    %c0_29 = arith.constant 0 : index
    %91 = vector.load %arg9[%90, %c0_29] : memref<64x128xf32, #tpu.memory_space<vmem>>, vector<8x128xf32>
    %cst_30 = arith.constant dense<0.000000e+00> : vector<8x128xf32>
    %92 = tpu.matmul %87, %0, %cst_30 {dimension_numbers = #tpu.dot_dimension_numbers<[1], [0], [0], [1], [0, 0, 1, 1], [], []>} : vector<8x32xf32>, vector<32x128xf32>, vector<8x128xf32> -> vector<8x128xf32>
    %93 = arith.addf %91, %92 : vector<8x128xf32>
    %cst_31 = arith.constant 5.000000e-01 : f32
    %94 = vector.broadcast %cst_31 : f32 to vector<8x128xf32>
    %95 = arith.mulf %94, %93 : vector<8x128xf32>
    %96 = arith.select %13, %93, %95 : vector<8x128xi1>, vector<8x128xf32>
    %97 = math.tanh %96 : vector<8x128xf32>
    %cst_32 = arith.constant 5.000000e-01 : f32
    %98 = vector.broadcast %cst_32 : f32 to vector<8x128xf32>
    %99 = arith.mulf %98, %97 : vector<8x128xf32>
    %cst_33 = arith.constant 5.000000e-01 : f32
    %100 = vector.broadcast %cst_33 : f32 to vector<8x128xf32>
    %101 = arith.addf %99, %100 : vector<8x128xf32>
    %102 = arith.select %13, %97, %101 : vector<8x128xi1>, vector<8x128xf32>
    %103 = vector.extract_strided_slice %102 {offsets = [0, 0], sizes = [8, 32], strides = [1, 1]} : vector<8x128xf32> to vector<8x32xf32>
    %104 = vector.extract_strided_slice %102 {offsets = [0, 32], sizes = [8, 32], strides = [1, 1]} : vector<8x128xf32> to vector<8x32xf32>
    %105 = vector.extract_strided_slice %102 {offsets = [0, 64], sizes = [8, 32], strides = [1, 1]} : vector<8x128xf32> to vector<8x32xf32>
    %106 = vector.extract_strided_slice %102 {offsets = [0, 96], sizes = [8, 32], strides = [1, 1]} : vector<8x128xf32> to vector<8x32xf32>
    %107 = arith.mulf %104, %85 : vector<8x32xf32>
    %108 = arith.mulf %103, %105 : vector<8x32xf32>
    %109 = arith.addf %107, %108 : vector<8x32xf32>
    %110 = math.tanh %109 : vector<8x32xf32>
    %111 = arith.mulf %106, %110 : vector<8x32xf32>
    %c4_i32 = arith.constant 4 : i32
    %c8_i32_34 = arith.constant 8 : i32
    %112 = arith.muli %c4_i32, %c8_i32_34 : i32
    %113 = tpu.assume_multiple %112, 8 : i32
    %114 = arith.index_cast %113 : i32 to index
    %c0_35 = arith.constant 0 : index
    %115 = vector.load %arg9[%114, %c0_35] : memref<64x128xf32, #tpu.memory_space<vmem>>, vector<8x128xf32>
    %cst_36 = arith.constant dense<0.000000e+00> : vector<8x128xf32>
    %116 = tpu.matmul %111, %0, %cst_36 {dimension_numbers = #tpu.dot_dimension_numbers<[1], [0], [0], [1], [0, 0, 1, 1], [], []>} : vector<8x32xf32>, vector<32x128xf32>, vector<8x128xf32> -> vector<8x128xf32>
    %117 = arith.addf %115, %116 : vector<8x128xf32>
    %cst_37 = arith.constant 5.000000e-01 : f32
    %118 = vector.broadcast %cst_37 : f32 to vector<8x128xf32>
    %119 = arith.mulf %118, %117 : vector<8x128xf32>
    %120 = arith.select %13, %117, %119 : vector<8x128xi1>, vector<8x128xf32>
    %121 = math.tanh %120 : vector<8x128xf32>
    %cst_38 = arith.constant 5.000000e-01 : f32
    %122 = vector.broadcast %cst_38 : f32 to vector<8x128xf32>
    %123 = arith.mulf %122, %121 : vector<8x128xf32>
    %cst_39 = arith.constant 5.000000e-01 : f32
    %124 = vector.broadcast %cst_39 : f32 to vector<8x128xf32>
    %125 = arith.addf %123, %124 : vector<8x128xf32>
    %126 = arith.select %13, %121, %125 : vector<8x128xi1>, vector<8x128xf32>
    %127 = vector.extract_strided_slice %126 {offsets = [0, 0], sizes = [8, 32], strides = [1, 1]} : vector<8x128xf32> to vector<8x32xf32>
    %128 = vector.extract_strided_slice %126 {offsets = [0, 32], sizes = [8, 32], strides = [1, 1]} : vector<8x128xf32> to vector<8x32xf32>
    %129 = vector.extract_strided_slice %126 {offsets = [0, 64], sizes = [8, 32], strides = [1, 1]} : vector<8x128xf32> to vector<8x32xf32>
    %130 = vector.extract_strided_slice %126 {offsets = [0, 96], sizes = [8, 32], strides = [1, 1]} : vector<8x128xf32> to vector<8x32xf32>
    %131 = arith.mulf %128, %109 : vector<8x32xf32>
    %132 = arith.mulf %127, %129 : vector<8x32xf32>
    %133 = arith.addf %131, %132 : vector<8x32xf32>
    %134 = math.tanh %133 : vector<8x32xf32>
    %135 = arith.mulf %130, %134 : vector<8x32xf32>
    %c5_i32 = arith.constant 5 : i32
    %c8_i32_40 = arith.constant 8 : i32
    %136 = arith.muli %c5_i32, %c8_i32_40 : i32
    %137 = tpu.assume_multiple %136, 8 : i32
    %138 = arith.index_cast %137 : i32 to index
    %c0_41 = arith.constant 0 : index
    %139 = vector.load %arg9[%138, %c0_41] : memref<64x128xf32, #tpu.memory_space<vmem>>, vector<8x128xf32>
    %cst_42 = arith.constant dense<0.000000e+00> : vector<8x128xf32>
    %140 = tpu.matmul %135, %0, %cst_42 {dimension_numbers = #tpu.dot_dimension_numbers<[1], [0], [0], [1], [0, 0, 1, 1], [], []>} : vector<8x32xf32>, vector<32x128xf32>, vector<8x128xf32> -> vector<8x128xf32>
    %141 = arith.addf %139, %140 : vector<8x128xf32>
    %cst_43 = arith.constant 5.000000e-01 : f32
    %142 = vector.broadcast %cst_43 : f32 to vector<8x128xf32>
    %143 = arith.mulf %142, %141 : vector<8x128xf32>
    %144 = arith.select %13, %141, %143 : vector<8x128xi1>, vector<8x128xf32>
    %145 = math.tanh %144 : vector<8x128xf32>
    %cst_44 = arith.constant 5.000000e-01 : f32
    %146 = vector.broadcast %cst_44 : f32 to vector<8x128xf32>
    %147 = arith.mulf %146, %145 : vector<8x128xf32>
    %cst_45 = arith.constant 5.000000e-01 : f32
    %148 = vector.broadcast %cst_45 : f32 to vector<8x128xf32>
    %149 = arith.addf %147, %148 : vector<8x128xf32>
    %150 = arith.select %13, %145, %149 : vector<8x128xi1>, vector<8x128xf32>
    %151 = vector.extract_strided_slice %150 {offsets = [0, 0], sizes = [8, 32], strides = [1, 1]} : vector<8x128xf32> to vector<8x32xf32>
    %152 = vector.extract_strided_slice %150 {offsets = [0, 32], sizes = [8, 32], strides = [1, 1]} : vector<8x128xf32> to vector<8x32xf32>
    %153 = vector.extract_strided_slice %150 {offsets = [0, 64], sizes = [8, 32], strides = [1, 1]} : vector<8x128xf32> to vector<8x32xf32>
    %154 = vector.extract_strided_slice %150 {offsets = [0, 96], sizes = [8, 32], strides = [1, 1]} : vector<8x128xf32> to vector<8x32xf32>
    %155 = arith.mulf %152, %133 : vector<8x32xf32>
    %156 = arith.mulf %151, %153 : vector<8x32xf32>
    %157 = arith.addf %155, %156 : vector<8x32xf32>
    %158 = math.tanh %157 : vector<8x32xf32>
    %159 = arith.mulf %154, %158 : vector<8x32xf32>
    %c6_i32 = arith.constant 6 : i32
    %c8_i32_46 = arith.constant 8 : i32
    %160 = arith.muli %c6_i32, %c8_i32_46 : i32
    %161 = tpu.assume_multiple %160, 8 : i32
    %162 = arith.index_cast %161 : i32 to index
    %c0_47 = arith.constant 0 : index
    %163 = vector.load %arg9[%162, %c0_47] : memref<64x128xf32, #tpu.memory_space<vmem>>, vector<8x128xf32>
    %cst_48 = arith.constant dense<0.000000e+00> : vector<8x128xf32>
    %164 = tpu.matmul %159, %0, %cst_48 {dimension_numbers = #tpu.dot_dimension_numbers<[1], [0], [0], [1], [0, 0, 1, 1], [], []>} : vector<8x32xf32>, vector<32x128xf32>, vector<8x128xf32> -> vector<8x128xf32>
    %165 = arith.addf %163, %164 : vector<8x128xf32>
    %cst_49 = arith.constant 5.000000e-01 : f32
    %166 = vector.broadcast %cst_49 : f32 to vector<8x128xf32>
    %167 = arith.mulf %166, %165 : vector<8x128xf32>
    %168 = arith.select %13, %165, %167 : vector<8x128xi1>, vector<8x128xf32>
    %169 = math.tanh %168 : vector<8x128xf32>
    %cst_50 = arith.constant 5.000000e-01 : f32
    %170 = vector.broadcast %cst_50 : f32 to vector<8x128xf32>
    %171 = arith.mulf %170, %169 : vector<8x128xf32>
    %cst_51 = arith.constant 5.000000e-01 : f32
    %172 = vector.broadcast %cst_51 : f32 to vector<8x128xf32>
    %173 = arith.addf %171, %172 : vector<8x128xf32>
    %174 = arith.select %13, %169, %173 : vector<8x128xi1>, vector<8x128xf32>
    %175 = vector.extract_strided_slice %174 {offsets = [0, 0], sizes = [8, 32], strides = [1, 1]} : vector<8x128xf32> to vector<8x32xf32>
    %176 = vector.extract_strided_slice %174 {offsets = [0, 32], sizes = [8, 32], strides = [1, 1]} : vector<8x128xf32> to vector<8x32xf32>
    %177 = vector.extract_strided_slice %174 {offsets = [0, 64], sizes = [8, 32], strides = [1, 1]} : vector<8x128xf32> to vector<8x32xf32>
    %178 = vector.extract_strided_slice %174 {offsets = [0, 96], sizes = [8, 32], strides = [1, 1]} : vector<8x128xf32> to vector<8x32xf32>
    %179 = arith.mulf %176, %157 : vector<8x32xf32>
    %180 = arith.mulf %175, %177 : vector<8x32xf32>
    %181 = arith.addf %179, %180 : vector<8x32xf32>
    %182 = math.tanh %181 : vector<8x32xf32>
    %183 = arith.mulf %178, %182 : vector<8x32xf32>
    %c7_i32 = arith.constant 7 : i32
    %c8_i32_52 = arith.constant 8 : i32
    %184 = arith.muli %c7_i32, %c8_i32_52 : i32
    %185 = tpu.assume_multiple %184, 8 : i32
    %186 = arith.index_cast %185 : i32 to index
    %c0_53 = arith.constant 0 : index
    %187 = vector.load %arg9[%186, %c0_53] : memref<64x128xf32, #tpu.memory_space<vmem>>, vector<8x128xf32>
    %cst_54 = arith.constant dense<0.000000e+00> : vector<8x128xf32>
    %188 = tpu.matmul %183, %0, %cst_54 {dimension_numbers = #tpu.dot_dimension_numbers<[1], [0], [0], [1], [0, 0, 1, 1], [], []>} : vector<8x32xf32>, vector<32x128xf32>, vector<8x128xf32> -> vector<8x128xf32>
    %189 = arith.addf %187, %188 : vector<8x128xf32>
    %cst_55 = arith.constant 5.000000e-01 : f32
    %190 = vector.broadcast %cst_55 : f32 to vector<8x128xf32>
    %191 = arith.mulf %190, %189 : vector<8x128xf32>
    %192 = arith.select %13, %189, %191 : vector<8x128xi1>, vector<8x128xf32>
    %193 = math.tanh %192 : vector<8x128xf32>
    %cst_56 = arith.constant 5.000000e-01 : f32
    %194 = vector.broadcast %cst_56 : f32 to vector<8x128xf32>
    %195 = arith.mulf %194, %193 : vector<8x128xf32>
    %cst_57 = arith.constant 5.000000e-01 : f32
    %196 = vector.broadcast %cst_57 : f32 to vector<8x128xf32>
    %197 = arith.addf %195, %196 : vector<8x128xf32>
    %198 = arith.select %13, %193, %197 : vector<8x128xi1>, vector<8x128xf32>
    %199 = vector.extract_strided_slice %198 {offsets = [0, 0], sizes = [8, 32], strides = [1, 1]} : vector<8x128xf32> to vector<8x32xf32>
    %200 = vector.extract_strided_slice %198 {offsets = [0, 32], sizes = [8, 32], strides = [1, 1]} : vector<8x128xf32> to vector<8x32xf32>
    %201 = vector.extract_strided_slice %198 {offsets = [0, 64], sizes = [8, 32], strides = [1, 1]} : vector<8x128xf32> to vector<8x32xf32>
    %202 = vector.extract_strided_slice %198 {offsets = [0, 96], sizes = [8, 32], strides = [1, 1]} : vector<8x128xf32> to vector<8x32xf32>
    %203 = arith.mulf %200, %181 : vector<8x32xf32>
    %204 = arith.mulf %199, %201 : vector<8x32xf32>
    %205 = arith.addf %203, %204 : vector<8x32xf32>
    %206 = math.tanh %205 : vector<8x32xf32>
    %207 = arith.mulf %202, %206 : vector<8x32xf32>
    %c8_i32_58 = arith.constant 8 : i32
    %cst_59 = arith.constant 0.000000e+00 : f32
    %208 = vector.broadcast %cst_59 : f32 to vector<8x32xf32>
    %209 = arith.maximumf %207, %208 : vector<8x32xf32>
    %c0_60 = arith.constant 0 : index
    %c0_61 = arith.constant 0 : index
    %210 = vector.load %arg4[%c0_60, %c0_61] : memref<32x32xf32, #tpu.memory_space<vmem>>, vector<32x32xf32>
    %cst_62 = arith.constant dense<0.000000e+00> : vector<8x32xf32>
    %211 = tpu.matmul %209, %210, %cst_62 {dimension_numbers = #tpu.dot_dimension_numbers<[1], [0], [0], [1], [0, 0, 1, 1], [], []>} : vector<8x32xf32>, vector<32x32xf32>, vector<8x32xf32> -> vector<8x32xf32>
    %c0_63 = arith.constant 0 : index
    %c0_64 = arith.constant 0 : index
    %212 = vector.load %arg5[%c0_63, %c0_64] : memref<1x32xf32, #tpu.memory_space<vmem>>, vector<1x32xf32>
    %213 = vector.broadcast %212 : vector<1x32xf32> to vector<8x32xf32>
    %214 = arith.addf %211, %213 : vector<8x32xf32>
    %cst_65 = arith.constant 0.000000e+00 : f32
    %215 = vector.broadcast %cst_65 : f32 to vector<8x32xf32>
    %216 = arith.maximumf %214, %215 : vector<8x32xf32>
    %c0_66 = arith.constant 0 : index
    %c0_67 = arith.constant 0 : index
    %217 = vector.load %arg6[%c0_66, %c0_67] : memref<32x1xf32, #tpu.memory_space<vmem>>, vector<32x1xf32>
    %cst_68 = arith.constant dense<0.000000e+00> : vector<8x1xf32>
    %218 = tpu.matmul %216, %217, %cst_68 {dimension_numbers = #tpu.dot_dimension_numbers<[1], [0], [0], [1], [0, 0, 1, 1], [], []>} : vector<8x32xf32>, vector<32x1xf32>, vector<8x1xf32> -> vector<8x1xf32>
    %c0_69 = arith.constant 0 : index
    %c0_70 = arith.constant 0 : index
    %219 = vector.load %arg7[%c0_69, %c0_70] : memref<1x1xf32, #tpu.memory_space<vmem>>, vector<1x1xf32>
    %220 = vector.broadcast %219 : vector<1x1xf32> to vector<8x1xf32>
    %221 = arith.addf %218, %220 : vector<8x1xf32>
    %c0_71 = arith.constant 0 : index
    %c0_72 = arith.constant 0 : index
    %222 = vector.load %arg8[%c0_71, %c0_72] : memref<8x1xf32, #tpu.memory_space<vmem>>, vector<8x1xf32>
    tpu.vector_store %arg8[%c0_71, %c0_72], %221 {strides = array<i32>} : memref<8x1xf32, #tpu.memory_space<vmem>>, vector<8x1xf32>,
    return
  }
}

</mosaic_0001>

<llo_original>
// kernel: tpu_custom_call.1
$region0: #{tpu_custom_call.1}
  #allocation0 [shape = 'u32[]', space=smem, size = 0x4, offset = 0x4, fixed_abs, tag = 'smem constant byte address 0x4 - core index']
  #allocation1 [shape = 'u32[144,128]{1,0:T(1,128)}', space=vmem, size = 0x12000, scoped, tag = 'internal scratch']
  #allocation2 [shape = 'f32[64,128]{1,0:T(8,128)}', space=vmem, size = 0x8000, scoped, tag = 'scratch operand']
  #allocation3 [shape = 'f32[1,1]{1,0:T(1,128)S(1)}', space=vmem, size = 0x200, scoped, tag = 'scoped memory for tpu_custom_call.1']
  %s0 = inlined_call_operand.vmem [shape: f32[64,4], index: 0, kind: input, shape index: {}]
  %s1 = inlined_call_operand.vmem [shape: f32[4,128], index: 1, kind: input, shape index: {}]
  %s2 = inlined_call_operand.vmem [shape: f32[32,128], index: 2, kind: input, shape index: {}]
  %s3 = inlined_call_operand.vmem [shape: f32[1,128], index: 3, kind: input, shape index: {}]
  %s4 = inlined_call_operand.vmem [shape: f32[32,32], index: 4, kind: input, shape index: {}]
  %s5 = inlined_call_operand.vmem [shape: f32[1,32], index: 5, kind: input, shape index: {}]
  %s6 = inlined_call_operand.vmem [shape: f32[32,1], index: 6, kind: input, shape index: {}]
  %s7 = inlined_call_operand.<no memory space> [shape: f32[1,1], index: 7, kind: input, shape index: {}]
  %s8 = inlined_call_operand.vmem [shape: f32[8,1], index: 8, kind: output, shape index: {}]
  %s9 = sld [smem:[#allocation0]]
  $region42: #{tpu_custom_call.1} parent=0
    _
  %s11 = ssub.s32 1, %s9
  %s12 = scalar_select 0, %s11, %s9
  %v13 = vstv %s7
  %14 = vst [vmem:[#allocation3] sm:$0x1] %v13
  // Predicated region
  $region2: #{tpu_custom_call.1} parent=0 // pred_check
    _
  $region3: #{tpu_custom_call.1} parent=0 // pred_check_branch
    %16 = sbr.rel (0) target = $region5
  $region4: #{tpu_custom_call.1} parent=0 // pred_region
    _
  $region5: #{tpu_custom_call.1} parent=0 // pred_fallthru
    _
  // Predicated region
  $region6: #{tpu_custom_call.1} parent=0 // pred_check
    _
  $region7: #{tpu_custom_call.1} parent=0 // pred_check_branch
    %18 = sbr.rel (0) target = $region9
  $region8: #{tpu_custom_call.1} parent=0 // pred_region
    _
  $region9: #{tpu_custom_call.1} parent=0 // pred_fallthru
    _
  // Predicated region
  $region10: #{tpu_custom_call.1} parent=0 // pred_check
    _
  $region11: #{tpu_custom_call.1} parent=0 // pred_check_branch
    %20 = sbr.rel (0) target = $region13
  $region12: #{tpu_custom_call.1} parent=0 // pred_region
    _
  $region13: #{tpu_custom_call.1} parent=0 // pred_fallthru
    _
  // Predicated region
  $region14: #{tpu_custom_call.1} parent=0 // pred_check
    _
  $region15: #{tpu_custom_call.1} parent=0 // pred_check_branch
    %22 = sbr.rel (0) target = $region17
  $region16: #{tpu_custom_call.1} parent=0 // pred_region
    _
  $region17: #{tpu_custom_call.1} parent=0 // pred_fallthru
    _
  // Predicated region
  $region18: #{tpu_custom_call.1} parent=0 // pred_check
    _
  $region19: #{tpu_custom_call.1} parent=0 // pred_check_branch
    %24 = sbr.rel (0) target = $region21
  $region20: #{tpu_custom_call.1} parent=0 // pred_region
    _
  $region21: #{tpu_custom_call.1} parent=0 // pred_fallthru
    _
  // Predicated region
  $region22: #{tpu_custom_call.1} parent=0 // pred_check
    _
  $region23: #{tpu_custom_call.1} parent=0 // pred_check_branch
    %26 = sbr.rel (0) target = $region25
  $region24: #{tpu_custom_call.1} parent=0 // pred_region
    _
  $region25: #{tpu_custom_call.1} parent=0 // pred_fallthru
    _
  // Predicated region
  $region26: #{tpu_custom_call.1} parent=0 // pred_check
    _
  $region27: #{tpu_custom_call.1} parent=0 // pred_check_branch
    %28 = sbr.rel (0) target = $region29
  $region28: #{tpu_custom_call.1} parent=0 // pred_region
    _
  $region29: #{tpu_custom_call.1} parent=0 // pred_fallthru
    _
  // Predicated region
  $region30: #{tpu_custom_call.1} parent=0 // pred_check
    _
  $region31: #{tpu_custom_call.1} parent=0 // pred_check_branch
    %30 = sbr.rel (0) target = $region33
  $region32: #{tpu_custom_call.1} parent=0 // pred_region
    _
  $region33: #{tpu_custom_call.1} parent=0 // pred_fallthru
    _
  %v31 = vld [vmem:[%s2] sm:$0xff]
  %v32 = vld [vmem:[%s2 + $0x8] sm:$0xff]
  %v33 = vld [vmem:[%s2 + $0x10] sm:$0xff]
  %v34 = vld [vmem:[%s2 + $0x18] sm:$0xff]
  %v35 = vld [vmem:[%s0] sm:$0xff]
  %v36 = vld [vmem:[%s0 + $0x8] sm:$0xff]
  %v37 = vld [vmem:[%s0 + $0x10] sm:$0xff]
  %v38 = vld [vmem:[%s0 + $0x18] sm:$0xff]
  %v39 = vld [vmem:[%s0 + $0x20] sm:$0xff]
  %v40 = vld [vmem:[%s0 + $0x28] sm:$0xff]
  %v41 = vld [vmem:[%s0 + $0x30] sm:$0xff]
  %v42 = vld [vmem:[%s0 + $0x38] sm:$0xff]
  %v43 = vld [vmem:[%s1] sm:$0xf]
  %v44 = vld [vmem:[%s3] sm:$0x1]
  %v46 = vlaneseq
  %v47 = vshrl.u32 %v46, 7
  %v48 = vsub.s32 0, %v47
  %v49 = vrot.slane %v44, %v48
  %vm51 = vcmask 31744
  %v53 = vsel %vm51, %v35, 0
  %v56 = vsel %vm51, %v36, 0
  %v59 = vsel %vm51, %v37, 0
  %v62 = vsel %vm51, %v38, 0
  %v65 = vsel %vm51, %v39, 0
  %v68 = vsel %vm51, %v40, 0
  %v71 = vsel %vm51, %v41, 0
  %v74 = vsel %vm51, %v42, 0
  %vm76 = vcmask 1043456
  %v78 = vsel %vm76, %v43, 0
  %80 = vmatprep.subr.mxu0 0.0
  %81 = vmatpush1.msra.mxu0 %v78
  %82 = vmatprep.subr.mxu0 0.0
  %83 = vmatpush1.msra.mxu0 0.0
  %84 = vmatprep.subr.mxu0 0.0
  %85 = vmatpush1.msra.mxu0 0.0
  %86 = vmatprep.subr.mxu0 0.0
  %87 = vmatpush1.msra.mxu0 0.0
  %88 = vmatprep.subr.mxu0 0.0
  %89 = vmatpush1.msra.mxu0 0.0
  %90 = vmatprep.subr.mxu0 0.0
  %91 = vmatpush1.msra.mxu0 0.0
  %92 = vmatprep.subr.mxu0 0.0
  %93 = vmatpush1.msra.mxu0 0.0
  %94 = vmatprep.subr.mxu0 0.0
  %95 = vmatpush1.msra.mxu0 0.0
  %96 = vmatprep.subr.mxu0 0.0
  %97 = vmatpush1.msra.mxu0 0.0
  %98 = vmatprep.subr.mxu0 0.0
  %99 = vmatpush1.msra.mxu0 0.0
  %100 = vmatprep.subr.mxu0 0.0
  %101 = vmatpush1.msra.mxu0 0.0
  %102 = vmatprep.subr.mxu0 0.0
  %103 = vmatpush1.msra.mxu0 0.0
  %104 = vmatprep.subr.mxu0 0.0
  %105 = vmatpush1.msra.mxu0 0.0
  %106 = vmatprep.subr.mxu0 0.0
  %107 = vmatpush1.msra.mxu0 0.0
  %108 = vmatprep.subr.mxu0 0.0
  %109 = vmatpush1.msra.mxu0 0.0
  %110 = vmatprep.subr.mxu0 0.0
  %111 = vmatpush1.msra.mxu0 0.0
  %112 = vmatprep.subr.mxu0 0.0
  %113 = vmatpush1.msra.mxu0 0.0
  %114 = vmatprep.subr.mxu0 0.0
  %115 = vmatpush1.msra.mxu0 0.0
  %116 = vmatprep.subr.mxu0 0.0
  %117 = vmatpush1.msra.mxu0 0.0
  %118 = vmatprep.subr.mxu0 0.0
  %119 = vmatpush1.msra.mxu0 0.0
  %120 = vmatprep.subr.mxu0 0.0
  %121 = vmatpush1.msra.mxu0 0.0
  %122 = vmatprep.subr.mxu0 0.0
  %123 = vmatpush1.msra.mxu0 0.0
  %124 = vmatprep.subr.mxu0 0.0
  %125 = vmatpush1.msra.mxu0 0.0
  %126 = vmatprep.subr.mxu0 0.0
  %127 = vmatpush1.msra.mxu0 0.0
  %128 = vmatprep.subr.mxu0 0.0
  %129 = vmatpush1.msra.mxu0 0.0
  %130 = vmatprep.subr.mxu0 0.0
  %131 = vmatpush1.msra.mxu0 0.0
  %132 = vmatprep.subr.mxu0 0.0
  %133 = vmatpush1.msra.mxu0 0.0
  %134 = vmatprep.subr.mxu0 0.0
  %135 = vmatpush1.msra.mxu0 0.0
  %136 = vmatprep.subr.mxu0 0.0
  %137 = vmatpush1.msra.mxu0 0.0
  %138 = vmatprep.subr.mxu0 0.0
  %139 = vmatpush1.msra.mxu0 0.0
  %140 = vmatprep.subr.mxu0 0.0
  %141 = vmatpush1.msra.mxu0 0.0
  %142 = vmatprep.subr.mxu0 0.0
  %143 = vmatpush1.msra.mxu0 0.0
  %144 = vmatprep.mubr.f32.mxu0 0.0
  %145 = vmatmul.mubr.f32.gmra.mrb[0].mxu0 %v53
  %v146 = vpop.f32.mrb[0].mxu0
  %v147 = vadd.f32 %v49, %v146
  %v148 = vpop.f32.mrb[0].mxu0
  %149 = vmatprep.mubr.f32.mxu0 0.0
  %150 = vmatmul.mubr.f32.gmra.mrb[0].mxu0 %v56
  %v151 = vpop.f32.mrb[0].mxu0
  %v152 = vadd.f32 %v49, %v151
  %v153 = vpop.f32.mrb[0].mxu0
  %154 = vmatprep.mubr.f32.mxu0 0.0
  %155 = vmatmul.mubr.f32.gmra.mrb[0].mxu0 %v59
  %v156 = vpop.f32.mrb[0].mxu0
  %v157 = vadd.f32 %v49, %v156
  %v158 = vpop.f32.mrb[0].mxu0
  %159 = vmatprep.mubr.f32.mxu0 0.0
  %160 = vmatmul.mubr.f32.gmra.mrb[0].mxu0 %v62
  %v161 = vpop.f32.mrb[0].mxu0
  %v162 = vadd.f32 %v49, %v161
  %v163 = vpop.f32.mrb[0].mxu0
  %164 = vmatprep.mubr.f32.mxu0 0.0
  %165 = vmatmul.mubr.f32.gmra.mrb[0].mxu0 %v65
  %v166 = vpop.f32.mrb[0].mxu0
  %v167 = vadd.f32 %v49, %v166
  %v168 = vpop.f32.mrb[0].mxu0
  %169 = vmatprep.mubr.f32.mxu0 0.0
  %170 = vmatmul.mubr.f32.gmra.mrb[0].mxu0 %v68
  %v171 = vpop.f32.mrb[0].mxu0
  %v172 = vadd.f32 %v49, %v171
  %v173 = vpop.f32.mrb[0].mxu0
  %174 = vmatprep.mubr.f32.mxu0 0.0
  %175 = vmatmul.mubr.f32.gmra.mrb[0].mxu0 %v71
  %v176 = vpop.f32.mrb[0].mxu0
  %v177 = vadd.f32 %v49, %v176
  %v178 = vpop.f32.mrb[0].mxu0
  %179 = vmatprep.mubr.f32.mxu0 0.0
  %180 = vmatmul.mubr.f32.gmra.mrb[0].mxu0 %v74
  %v181 = vpop.f32.mrb[0].mxu0
  %v182 = vadd.f32 %v49, %v181
  %v183 = vpop.f32.mrb[0].mxu0
  %184 = vdwg.mxu0
  %185 = vst [vmem:[#allocation2] sm:$0xff] %v147
  %186 = vst [vmem:[#allocation2 + $0x8] sm:$0xff] %v152
  %187 = vst [vmem:[#allocation2 + $0x10] sm:$0xff] %v157
  %188 = vst [vmem:[#allocation2 + $0x18] sm:$0xff] %v162
  %189 = vst [vmem:[#allocation2 + $0x20] sm:$0xff] %v167
  %190 = vst [vmem:[#allocation2 + $0x28] sm:$0xff] %v172
  %191 = vst [vmem:[#allocation2 + $0x30] sm:$0xff] %v177
  %192 = vst [vmem:[#allocation2 + $0x38] sm:$0xff] %v182
  %v193 = vlaneseq
  %v194 = vand.u32 %v193, 127
  %vm195 = vcmp.ge.s32.totalorder %v194, 64
  %vm196 = vcmp.lt.s32.totalorder %v194, 96
  %vm197 = vmand %vm195, %vm196
  %v198 = vld [vmem:[#allocation2] sm:$0xff]
  %vm199 = vcmask 261120
  %v201 = vsel %vm199, 0.0, 0
  %203 = vmatprep.subr.mxu0 0.0
  %204 = vmatpush1.msra.mxu0 %v31
  %205 = vmatprep.subr.mxu0 0.0
  %206 = vmatpush1.msra.mxu0 %v32
  %207 = vmatprep.subr.mxu0 0.0
  %208 = vmatpush1.msra.mxu0 %v33
  %209 = vmatprep.subr.mxu0 0.0
  %210 = vmatpush1.msra.mxu0 %v34
  %211 = vmatprep.subr.mxu0 0.0
  %212 = vmatpush1.msra.mxu0 0.0
  %213 = vmatprep.subr.mxu0 0.0
  %214 = vmatpush1.msra.mxu0 0.0
  %215 = vmatprep.subr.mxu0 0.0
  %216 = vmatpush1.msra.mxu0 0.0
  %217 = vmatprep.subr.mxu0 0.0
  %218 = vmatpush1.msra.mxu0 0.0
  %219 = vmatprep.subr.mxu0 0.0
  %220 = vmatpush1.msra.mxu0 0.0
  %221 = vmatprep.subr.mxu0 0.0
  %222 = vmatpush1.msra.mxu0 0.0
  %223 = vmatprep.subr.mxu0 0.0
  %224 = vmatpush1.msra.mxu0 0.0
  %225 = vmatprep.subr.mxu0 0.0
  %226 = vmatpush1.msra.mxu0 0.0
  %227 = vmatprep.subr.mxu0 0.0
  %228 = vmatpush1.msra.mxu0 0.0
  %229 = vmatprep.subr.mxu0 0.0
  %230 = vmatpush1.msra.mxu0 0.0
  %231 = vmatprep.subr.mxu0 0.0
  %232 = vmatpush1.msra.mxu0 0.0
  %233 = vmatprep.subr.mxu0 0.0
  %234 = vmatpush1.msra.mxu0 0.0
  %235 = vmatprep.subr.mxu0 0.0
  %236 = vmatpush1.msra.mxu0 0.0
  %237 = vmatprep.subr.mxu0 0.0
  %238 = vmatpush1.msra.mxu0 0.0
  %239 = vmatprep.subr.mxu0 0.0
  %240 = vmatpush1.msra.mxu0 0.0
  %241 = vmatprep.subr.mxu0 0.0
  %242 = vmatpush1.msra.mxu0 0.0
  %243 = vmatprep.subr.mxu0 0.0
  %244 = vmatpush1.msra.mxu0 0.0
  %245 = vmatprep.subr.mxu0 0.0
  %246 = vmatpush1.msra.mxu0 0.0
  %247 = vmatprep.subr.mxu0 0.0
  %248 = vmatpush1.msra.mxu0 0.0
  %249 = vmatprep.subr.mxu0 0.0
  %250 = vmatpush1.msra.mxu0 0.0
  %251 = vmatprep.subr.mxu0 0.0
  %252 = vmatpush1.msra.mxu0 0.0
  %253 = vmatprep.subr.mxu0 0.0
  %254 = vmatpush1.msra.mxu0 0.0
  %255 = vmatprep.subr.mxu0 0.0
  %256 = vmatpush1.msra.mxu0 0.0
  %257 = vmatprep.subr.mxu0 0.0
  %258 = vmatpush1.msra.mxu0 0.0
  %259 = vmatprep.subr.mxu0 0.0
  %260 = vmatpush1.msra.mxu0 0.0
  %261 = vmatprep.subr.mxu0 0.0
  %262 = vmatpush1.msra.mxu0 0.0
  %263 = vmatprep.subr.mxu0 0.0
  %264 = vmatpush1.msra.mxu0 0.0
  %265 = vmatprep.subr.mxu0 0.0
  %266 = vmatpush1.msra.mxu0 0.0
  %267 = vmatprep.mubr.f32.mxu0 0.0
  %268 = vmatmul.mubr.f32.gmra.mrb[0].mxu0 %v201
  %v269 = vpop.f32.mrb[0].mxu0
  %v270 = vadd.f32 0.0, %v269
  %v271 = vpop.f32.mrb[0].mxu0
  %272 = vdwg.mxu0
  %v273 = vadd.f32 %v198, %v270
  %v274 = vmul.f32 %v273, 0.5
  %v275 = vsel %vm197, %v273, %v274
  %v276 = vtanh.pop %v275
  %v277 = vmul.f32 %v276, 0.5
  %v278 = vadd.f32 %v277, 0.5
  %v279 = vsel %vm197, %v276, %v278
  %v280 = vmul.f32 %v279, 0.0
  %282 = vrot.lane.b32.xlu0 %v279, 64
  %v283 = vpop.permute.xlu0 %282
  %v285 = vmul.f32 %v279, %v283
  %287 = vrot.lane.b32.xlu0 %v285, 32
  %v288 = vpop.permute.xlu0 %287
  %v290 = vadd.f32 %v280, %v288
  %v291 = vtanh.pop %v290
  %293 = vrot.lane.b32.xlu0 %v291, 64
  %v294 = vpop.permute.xlu0 %293
  %v296 = vmul.f32 %v279, %v294
  %s297 = scalar_lea.vmem [#allocation2], 8
  %v298 = vld [vmem:[%s297] sm:$0xff]
  %300 = vrot.lane.b32.xlu0 %v296, 32
  %v301 = vpop.permute.xlu0 %300
  %v302 = vsel %vm199, %v301, 0
  %304 = vmatprep.subr.mxu0 0.0
  %305 = vmatpush1.msra.mxu0 %v31
  %306 = vmatprep.subr.mxu0 0.0
  %307 = vmatpush1.msra.mxu0 %v32
  %308 = vmatprep.subr.mxu0 0.0
  %309 = vmatpush1.msra.mxu0 %v33
  %310 = vmatprep.subr.mxu0 0.0
  %311 = vmatpush1.msra.mxu0 %v34
  %312 = vmatprep.subr.mxu0 0.0
  %313 = vmatpush1.msra.mxu0 0.0
  %314 = vmatprep.subr.mxu0 0.0
  %315 = vmatpush1.msra.mxu0 0.0
  %316 = vmatprep.subr.mxu0 0.0
  %317 = vmatpush1.msra.mxu0 0.0
  %318 = vmatprep.subr.mxu0 0.0
  %319 = vmatpush1.msra.mxu0 0.0
  %320 = vmatprep.subr.mxu0 0.0
  %321 = vmatpush1.msra.mxu0 0.0
  %322 = vmatprep.subr.mxu0 0.0
  %323 = vmatpush1.msra.mxu0 0.0
  %324 = vmatprep.subr.mxu0 0.0
  %325 = vmatpush1.msra.mxu0 0.0
  %326 = vmatprep.subr.mxu0 0.0
  %327 = vmatpush1.msra.mxu0 0.0
  %328 = vmatprep.subr.mxu0 0.0
  %329 = vmatpush1.msra.mxu0 0.0
  %330 = vmatprep.subr.mxu0 0.0
  %331 = vmatpush1.msra.mxu0 0.0
  %332 = vmatprep.subr.mxu0 0.0
  %333 = vmatpush1.msra.mxu0 0.0
  %334 = vmatprep.subr.mxu0 0.0
  %335 = vmatpush1.msra.mxu0 0.0
  %336 = vmatprep.subr.mxu0 0.0
  %337 = vmatpush1.msra.mxu0 0.0
  %338 = vmatprep.subr.mxu0 0.0
  %339 = vmatpush1.msra.mxu0 0.0
  %340 = vmatprep.subr.mxu0 0.0
  %341 = vmatpush1.msra.mxu0 0.0
  %342 = vmatprep.subr.mxu0 0.0
  %343 = vmatpush1.msra.mxu0 0.0
  %344 = vmatprep.subr.mxu0 0.0
  %345 = vmatpush1.msra.mxu0 0.0
  %346 = vmatprep.subr.mxu0 0.0
  %347 = vmatpush1.msra.mxu0 0.0
  %348 = vmatprep.subr.mxu0 0.0
  %349 = vmatpush1.msra.mxu0 0.0
  %350 = vmatprep.subr.mxu0 0.0
  %351 = vmatpush1.msra.mxu0 0.0
  %352 = vmatprep.subr.mxu0 0.0
  %353 = vmatpush1.msra.mxu0 0.0
  %354 = vmatprep.subr.mxu0 0.0
  %355 = vmatpush1.msra.mxu0 0.0
  %356 = vmatprep.subr.mxu0 0.0
  %357 = vmatpush1.msra.mxu0 0.0
  %358 = vmatprep.subr.mxu0 0.0
  %359 = vmatpush1.msra.mxu0 0.0
  %360 = vmatprep.subr.mxu0 0.0
  %361 = vmatpush1.msra.mxu0 0.0
  %362 = vmatprep.subr.mxu0 0.0
  %363 = vmatpush1.msra.mxu0 0.0
  %364 = vmatprep.subr.mxu0 0.0
  %365 = vmatpush1.msra.mxu0 0.0
  %366 = vmatprep.subr.mxu0 0.0
  %367 = vmatpush1.msra.mxu0 0.0
  %368 = vmatprep.mubr.f32.mxu0 0.0
  %369 = vmatmul.mubr.f32.gmra.mrb[0].mxu0 %v302
  %v370 = vpop.f32.mrb[0].mxu0
  %v371 = vadd.f32 0.0, %v370
  %v372 = vpop.f32.mrb[0].mxu0
  %373 = vdwg.mxu0
  %v374 = vadd.f32 %v298, %v371
  %v375 = vmul.f32 %v374, 0.5
  %v376 = vsel %vm197, %v374, %v375
  %v377 = vtanh.pop %v376
  %v378 = vmul.f32 %v377, 0.5
  %v379 = vadd.f32 %v378, 0.5
  %v380 = vsel %vm197, %v377, %v379
  %v381 = vmul.f32 %v380, %v290
  %383 = vrot.lane.b32.xlu0 %v380, 64
  %v384 = vpop.permute.xlu0 %383
  %v386 = vmul.f32 %v380, %v384
  %388 = vrot.lane.b32.xlu0 %v386, 32
  %v389 = vpop.permute.xlu0 %388
  %v391 = vadd.f32 %v381, %v389
  %v392 = vtanh.pop %v391
  %394 = vrot.lane.b32.xlu0 %v392, 64
  %v395 = vpop.permute.xlu0 %394
  %v397 = vmul.f32 %v380, %v395
  %s398 = scalar_lea.vmem [#allocation2], 16
  %v399 = vld [vmem:[%s398] sm:$0xff]
  %401 = vrot.lane.b32.xlu0 %v397, 32
  %v402 = vpop.permute.xlu0 %401
  %v403 = vsel %vm199, %v402, 0
  %405 = vmatprep.subr.mxu0 0.0
  %406 = vmatpush1.msra.mxu0 %v31
  %407 = vmatprep.subr.mxu0 0.0
  %408 = vmatpush1.msra.mxu0 %v32
  %409 = vmatprep.subr.mxu0 0.0
  %410 = vmatpush1.msra.mxu0 %v33
  %411 = vmatprep.subr.mxu0 0.0
  %412 = vmatpush1.msra.mxu0 %v34
  %413 = vmatprep.subr.mxu0 0.0
  %414 = vmatpush1.msra.mxu0 0.0
  %415 = vmatprep.subr.mxu0 0.0
  %416 = vmatpush1.msra.mxu0 0.0
  %417 = vmatprep.subr.mxu0 0.0
  %418 = vmatpush1.msra.mxu0 0.0
  %419 = vmatprep.subr.mxu0 0.0
  %420 = vmatpush1.msra.mxu0 0.0
  %421 = vmatprep.subr.mxu0 0.0
  %422 = vmatpush1.msra.mxu0 0.0
  %423 = vmatprep.subr.mxu0 0.0
  %424 = vmatpush1.msra.mxu0 0.0
  %425 = vmatprep.subr.mxu0 0.0
  %426 = vmatpush1.msra.mxu0 0.0
  %427 = vmatprep.subr.mxu0 0.0
  %428 = vmatpush1.msra.mxu0 0.0
  %429 = vmatprep.subr.mxu0 0.0
  %430 = vmatpush1.msra.mxu0 0.0
  %431 = vmatprep.subr.mxu0 0.0
  %432 = vmatpush1.msra.mxu0 0.0
  %433 = vmatprep.subr.mxu0 0.0
  %434 = vmatpush1.msra.mxu0 0.0
  %435 = vmatprep.subr.mxu0 0.0
  %436 = vmatpush1.msra.mxu0 0.0
  %437 = vmatprep.subr.mxu0 0.0
  %438 = vmatpush1.msra.mxu0 0.0
  %439 = vmatprep.subr.mxu0 0.0
  %440 = vmatpush1.msra.mxu0 0.0
  %441 = vmatprep.subr.mxu0 0.0
  %442 = vmatpush1.msra.mxu0 0.0
  %443 = vmatprep.subr.mxu0 0.0
  %444 = vmatpush1.msra.mxu0 0.0
  %445 = vmatprep.subr.mxu0 0.0
  %446 = vmatpush1.msra.mxu0 0.0
  %447 = vmatprep.subr.mxu0 0.0
  %448 = vmatpush1.msra.mxu0 0.0
  %449 = vmatprep.subr.mxu0 0.0
  %450 = vmatpush1.msra.mxu0 0.0
  %451 = vmatprep.subr.mxu0 0.0
  %452 = vmatpush1.msra.mxu0 0.0
  %453 = vmatprep.subr.mxu0 0.0
  %454 = vmatpush1.msra.mxu0 0.0
  %455 = vmatprep.subr.mxu0 0.0
  %456 = vmatpush1.msra.mxu0 0.0
  %457 = vmatprep.subr.mxu0 0.0
  %458 = vmatpush1.msra.mxu0 0.0
  %459 = vmatprep.subr.mxu0 0.0
  %460 = vmatpush1.msra.mxu0 0.0
  %461 = vmatprep.subr.mxu0 0.0
  %462 = vmatpush1.msra.mxu0 0.0
  %463 = vmatprep.subr.mxu0 0.0
  %464 = vmatpush1.msra.mxu0 0.0
  %465 = vmatprep.subr.mxu0 0.0
  %466 = vmatpush1.msra.mxu0 0.0
  %467 = vmatprep.subr.mxu0 0.0
  %468 = vmatpush1.msra.mxu0 0.0
  %469 = vmatprep.mubr.f32.mxu0 0.0
  %470 = vmatmul.mubr.f32.gmra.mrb[0].mxu0 %v403
  %v471 = vpop.f32.mrb[0].mxu0
  %v472 = vadd.f32 0.0, %v471
  %v473 = vpop.f32.mrb[0].mxu0
  %474 = vdwg.mxu0
  %v475 = vadd.f32 %v399, %v472
  %v476 = vmul.f32 %v475, 0.5
  %v477 = vsel %vm197, %v475, %v476
  %v478 = vtanh.pop %v477
  %v479 = vmul.f32 %v478, 0.5
  %v480 = vadd.f32 %v479, 0.5
  %v481 = vsel %vm197, %v478, %v480
  %v482 = vmul.f32 %v481, %v391
  %484 = vrot.lane.b32.xlu0 %v481, 64
  %v485 = vpop.permute.xlu0 %484
  %v487 = vmul.f32 %v481, %v485
  %489 = vrot.lane.b32.xlu0 %v487, 32
  %v490 = vpop.permute.xlu0 %489
  %v492 = vadd.f32 %v482, %v490
  %v493 = vtanh.pop %v492
  %495 = vrot.lane.b32.xlu0 %v493, 64
  %v496 = vpop.permute.xlu0 %495
  %v498 = vmul.f32 %v481, %v496
  %s499 = scalar_lea.vmem [#allocation2], 24
  %v500 = vld [vmem:[%s499] sm:$0xff]
  %502 = vrot.lane.b32.xlu0 %v498, 32
  %v503 = vpop.permute.xlu0 %502
  %v504 = vsel %vm199, %v503, 0
  %506 = vmatprep.subr.mxu0 0.0
  %507 = vmatpush1.msra.mxu0 %v31
  %508 = vmatprep.subr.mxu0 0.0
  %509 = vmatpush1.msra.mxu0 %v32
  %510 = vmatprep.subr.mxu0 0.0
  %511 = vmatpush1.msra.mxu0 %v33
  %512 = vmatprep.subr.mxu0 0.0
  %513 = vmatpush1.msra.mxu0 %v34
  %514 = vmatprep.subr.mxu0 0.0
  %515 = vmatpush1.msra.mxu0 0.0
  %516 = vmatprep.subr.mxu0 0.0
  %517 = vmatpush1.msra.mxu0 0.0
  %518 = vmatprep.subr.mxu0 0.0
  %519 = vmatpush1.msra.mxu0 0.0
  %520 = vmatprep.subr.mxu0 0.0
  %521 = vmatpush1.msra.mxu0 0.0
  %522 = vmatprep.subr.mxu0 0.0
  %523 = vmatpush1.msra.mxu0 0.0
  %524 = vmatprep.subr.mxu0 0.0
  %525 = vmatpush1.msra.mxu0 0.0
  %526 = vmatprep.subr.mxu0 0.0
  %527 = vmatpush1.msra.mxu0 0.0
  %528 = vmatprep.subr.mxu0 0.0
  %529 = vmatpush1.msra.mxu0 0.0
  %530 = vmatprep.subr.mxu0 0.0
  %531 = vmatpush1.msra.mxu0 0.0
  %532 = vmatprep.subr.mxu0 0.0
  %533 = vmatpush1.msra.mxu0 0.0
  %534 = vmatprep.subr.mxu0 0.0
  %535 = vmatpush1.msra.mxu0 0.0
  %536 = vmatprep.subr.mxu0 0.0
  %537 = vmatpush1.msra.mxu0 0.0
  %538 = vmatprep.subr.mxu0 0.0
  %539 = vmatpush1.msra.mxu0 0.0
  %540 = vmatprep.subr.mxu0 0.0
  %541 = vmatpush1.msra.mxu0 0.0
  %542 = vmatprep.subr.mxu0 0.0
  %543 = vmatpush1.msra.mxu0 0.0
  %544 = vmatprep.subr.mxu0 0.0
  %545 = vmatpush1.msra.mxu0 0.0
  %546 = vmatprep.subr.mxu0 0.0
  %547 = vmatpush1.msra.mxu0 0.0
  %548 = vmatprep.subr.mxu0 0.0
  %549 = vmatpush1.msra.mxu0 0.0
  %550 = vmatprep.subr.mxu0 0.0
  %551 = vmatpush1.msra.mxu0 0.0
  %552 = vmatprep.subr.mxu0 0.0
  %553 = vmatpush1.msra.mxu0 0.0
  %554 = vmatprep.subr.mxu0 0.0
  %555 = vmatpush1.msra.mxu0 0.0
  %556 = vmatprep.subr.mxu0 0.0
  %557 = vmatpush1.msra.mxu0 0.0
  %558 = vmatprep.subr.mxu0 0.0
  %559 = vmatpush1.msra.mxu0 0.0
  %560 = vmatprep.subr.mxu0 0.0
  %561 = vmatpush1.msra.mxu0 0.0
  %562 = vmatprep.subr.mxu0 0.0
  %563 = vmatpush1.msra.mxu0 0.0
  %564 = vmatprep.subr.mxu0 0.0
  %565 = vmatpush1.msra.mxu0 0.0
  %566 = vmatprep.subr.mxu0 0.0
  %567 = vmatpush1.msra.mxu0 0.0
  %568 = vmatprep.subr.mxu0 0.0
  %569 = vmatpush1.msra.mxu0 0.0
  %570 = vmatprep.mubr.f32.mxu0 0.0
  %571 = vmatmul.mubr.f32.gmra.mrb[0].mxu0 %v504
  %v572 = vpop.f32.mrb[0].mxu0
  %v573 = vadd.f32 0.0, %v572
  %v574 = vpop.f32.mrb[0].mxu0
  %575 = vdwg.mxu0
  %v576 = vadd.f32 %v500, %v573
  %v577 = vmul.f32 %v576, 0.5
  %v578 = vsel %vm197, %v576, %v577
  %v579 = vtanh.pop %v578
  %v580 = vmul.f32 %v579, 0.5
  %v581 = vadd.f32 %v580, 0.5
  %v582 = vsel %vm197, %v579, %v581
  %v583 = vmul.f32 %v582, %v492
  %585 = vrot.lane.b32.xlu0 %v582, 64
  %v586 = vpop.permute.xlu0 %585
  %v588 = vmul.f32 %v582, %v586
  %590 = vrot.lane.b32.xlu0 %v588, 32
  %v591 = vpop.permute.xlu0 %590
  %v593 = vadd.f32 %v583, %v591
  %v594 = vtanh.pop %v593
  %596 = vrot.lane.b32.xlu0 %v594, 64
  %v597 = vpop.permute.xlu0 %596
  %v599 = vmul.f32 %v582, %v597
  %s600 = scalar_lea.vmem [#allocation2], 32
  %v601 = vld [vmem:[%s600] sm:$0xff]
  %603 = vrot.lane.b32.xlu0 %v599, 32
  %v604 = vpop.permute.xlu0 %603
  %v605 = vsel %vm199, %v604, 0
  %607 = vmatprep.subr.mxu0 0.0
  %608 = vmatpush1.msra.mxu0 %v31
  %609 = vmatprep.subr.mxu0 0.0
  %610 = vmatpush1.msra.mxu0 %v32
  %611 = vmatprep.subr.mxu0 0.0
  %612 = vmatpush1.msra.mxu0 %v33
  %613 = vmatprep.subr.mxu0 0.0
  %614 = vmatpush1.msra.mxu0 %v34
  %615 = vmatprep.subr.mxu0 0.0
  %616 = vmatpush1.msra.mxu0 0.0
  %617 = vmatprep.subr.mxu0 0.0
  %618 = vmatpush1.msra.mxu0 0.0
  %619 = vmatprep.subr.mxu0 0.0
  %620 = vmatpush1.msra.mxu0 0.0
  %621 = vmatprep.subr.mxu0 0.0
  %622 = vmatpush1.msra.mxu0 0.0
  %623 = vmatprep.subr.mxu0 0.0
  %624 = vmatpush1.msra.mxu0 0.0
  %625 = vmatprep.subr.mxu0 0.0
  %626 = vmatpush1.msra.mxu0 0.0
  %627 = vmatprep.subr.mxu0 0.0
  %628 = vmatpush1.msra.mxu0 0.0
  %629 = vmatprep.subr.mxu0 0.0
  %630 = vmatpush1.msra.mxu0 0.0
  %631 = vmatprep.subr.mxu0 0.0
  %632 = vmatpush1.msra.mxu0 0.0
  %633 = vmatprep.subr.mxu0 0.0
  %634 = vmatpush1.msra.mxu0 0.0
  %635 = vmatprep.subr.mxu0 0.0
  %636 = vmatpush1.msra.mxu0 0.0
  %637 = vmatprep.subr.mxu0 0.0
  %638 = vmatpush1.msra.mxu0 0.0
  %639 = vmatprep.subr.mxu0 0.0
  %640 = vmatpush1.msra.mxu0 0.0
  %641 = vmatprep.subr.mxu0 0.0
  %642 = vmatpush1.msra.mxu0 0.0
  %643 = vmatprep.subr.mxu0 0.0
  %644 = vmatpush1.msra.mxu0 0.0
  %645 = vmatprep.subr.mxu0 0.0
  %646 = vmatpush1.msra.mxu0 0.0
  %647 = vmatprep.subr.mxu0 0.0
  %648 = vmatpush1.msra.mxu0 0.0
  %649 = vmatprep.subr.mxu0 0.0
  %650 = vmatpush1.msra.mxu0 0.0
  %651 = vmatprep.subr.mxu0 0.0
  %652 = vmatpush1.msra.mxu0 0.0
  %653 = vmatprep.subr.mxu0 0.0
  %654 = vmatpush1.msra.mxu0 0.0
  %655 = vmatprep.subr.mxu0 0.0
  %656 = vmatpush1.msra.mxu0 0.0
  %657 = vmatprep.subr.mxu0 0.0
  %658 = vmatpush1.msra.mxu0 0.0
  %659 = vmatprep.subr.mxu0 0.0
  %660 = vmatpush1.msra.mxu0 0.0
  %661 = vmatprep.subr.mxu0 0.0
  %662 = vmatpush1.msra.mxu0 0.0
  %663 = vmatprep.subr.mxu0 0.0
  %664 = vmatpush1.msra.mxu0 0.0
  %665 = vmatprep.subr.mxu0 0.0
  %666 = vmatpush1.msra.mxu0 0.0
  %667 = vmatprep.subr.mxu0 0.0
  %668 = vmatpush1.msra.mxu0 0.0
  %669 = vmatprep.subr.mxu0 0.0
  %670 = vmatpush1.msra.mxu0 0.0
  %671 = vmatprep.mubr.f32.mxu0 0.0
  %672 = vmatmul.mubr.f32.gmra.mrb[0].mxu0 %v605
  %v673 = vpop.f32.mrb[0].mxu0
  %v674 = vadd.f32 0.0, %v673
  %v675 = vpop.f32.mrb[0].mxu0
  %676 = vdwg.mxu0
  %v677 = vadd.f32 %v601, %v674
  %v678 = vmul.f32 %v677, 0.5
  %v679 = vsel %vm197, %v677, %v678
  %v680 = vtanh.pop %v679
  %v681 = vmul.f32 %v680, 0.5
  %v682 = vadd.f32 %v681, 0.5
  %v683 = vsel %vm197, %v680, %v682
  %v684 = vmul.f32 %v683, %v593
  %686 = vrot.lane.b32.xlu0 %v683, 64
  %v687 = vpop.permute.xlu0 %686
  %v689 = vmul.f32 %v683, %v687
  %691 = vrot.lane.b32.xlu0 %v689, 32
  %v692 = vpop.permute.xlu0 %691
  %v694 = vadd.f32 %v684, %v692
  %v695 = vtanh.pop %v694
  %697 = vrot.lane.b32.xlu0 %v695, 64
  %v698 = vpop.permute.xlu0 %697
  %v700 = vmul.f32 %v683, %v698
  %s701 = scalar_lea.vmem [#allocation2], 40
  %v702 = vld [vmem:[%s701] sm:$0xff]
  %704 = vrot.lane.b32.xlu0 %v700, 32
  %v705 = vpop.permute.xlu0 %704
  %v706 = vsel %vm199, %v705, 0
  %708 = vmatprep.subr.mxu0 0.0
  %709 = vmatpush1.msra.mxu0 %v31
  %710 = vmatprep.subr.mxu0 0.0
  %711 = vmatpush1.msra.mxu0 %v32
  %712 = vmatprep.subr.mxu0 0.0
  %713 = vmatpush1.msra.mxu0 %v33
  %714 = vmatprep.subr.mxu0 0.0
  %715 = vmatpush1.msra.mxu0 %v34
  %716 = vmatprep.subr.mxu0 0.0
  %717 = vmatpush1.msra.mxu0 0.0
  %718 = vmatprep.subr.mxu0 0.0
  %719 = vmatpush1.msra.mxu0 0.0
  %720 = vmatprep.subr.mxu0 0.0
  %721 = vmatpush1.msra.mxu0 0.0
  %722 = vmatprep.subr.mxu0 0.0
  %723 = vmatpush1.msra.mxu0 0.0
  %724 = vmatprep.subr.mxu0 0.0
  %725 = vmatpush1.msra.mxu0 0.0
  %726 = vmatprep.subr.mxu0 0.0
  %727 = vmatpush1.msra.mxu0 0.0
  %728 = vmatprep.subr.mxu0 0.0
  %729 = vmatpush1.msra.mxu0 0.0
  %730 = vmatprep.subr.mxu0 0.0
  %731 = vmatpush1.msra.mxu0 0.0
  %732 = vmatprep.subr.mxu0 0.0
  %733 = vmatpush1.msra.mxu0 0.0
  %734 = vmatprep.subr.mxu0 0.0
  %735 = vmatpush1.msra.mxu0 0.0
  %736 = vmatprep.subr.mxu0 0.0
  %737 = vmatpush1.msra.mxu0 0.0
  %738 = vmatprep.subr.mxu0 0.0
  %739 = vmatpush1.msra.mxu0 0.0
  %740 = vmatprep.subr.mxu0 0.0
  %741 = vmatpush1.msra.mxu0 0.0
  %742 = vmatprep.subr.mxu0 0.0
  %743 = vmatpush1.msra.mxu0 0.0
  %744 = vmatprep.subr.mxu0 0.0
  %745 = vmatpush1.msra.mxu0 0.0
  %746 = vmatprep.subr.mxu0 0.0
  %747 = vmatpush1.msra.mxu0 0.0
  %748 = vmatprep.subr.mxu0 0.0
  %749 = vmatpush1.msra.mxu0 0.0
  %750 = vmatprep.subr.mxu0 0.0
  %751 = vmatpush1.msra.mxu0 0.0
  %752 = vmatprep.subr.mxu0 0.0
  %753 = vmatpush1.msra.mxu0 0.0
  %754 = vmatprep.subr.mxu0 0.0
  %755 = vmatpush1.msra.mxu0 0.0
  %756 = vmatprep.subr.mxu0 0.0
  %757 = vmatpush1.msra.mxu0 0.0
  %758 = vmatprep.subr.mxu0 0.0
  %759 = vmatpush1.msra.mxu0 0.0
  %760 = vmatprep.subr.mxu0 0.0
  %761 = vmatpush1.msra.mxu0 0.0
  %762 = vmatprep.subr.mxu0 0.0
  %763 = vmatpush1.msra.mxu0 0.0
  %764 = vmatprep.subr.mxu0 0.0
  %765 = vmatpush1.msra.mxu0 0.0
  %766 = vmatprep.subr.mxu0 0.0
  %767 = vmatpush1.msra.mxu0 0.0
  %768 = vmatprep.subr.mxu0 0.0
  %769 = vmatpush1.msra.mxu0 0.0
  %770 = vmatprep.subr.mxu0 0.0
  %771 = vmatpush1.msra.mxu0 0.0
  %772 = vmatprep.mubr.f32.mxu0 0.0
  %773 = vmatmul.mubr.f32.gmra.mrb[0].mxu0 %v706
  %v774 = vpop.f32.mrb[0].mxu0
  %v775 = vadd.f32 0.0, %v774
  %v776 = vpop.f32.mrb[0].mxu0
  %777 = vdwg.mxu0
  %v778 = vadd.f32 %v702, %v775
  %v779 = vmul.f32 %v778, 0.5
  %v780 = vsel %vm197, %v778, %v779
  %v781 = vtanh.pop %v780
  %v782 = vmul.f32 %v781, 0.5
  %v783 = vadd.f32 %v782, 0.5
  %v784 = vsel %vm197, %v781, %v783
  %v785 = vmul.f32 %v784, %v694
  %787 = vrot.lane.b32.xlu0 %v784, 64
  %v788 = vpop.permute.xlu0 %787
  %v790 = vmul.f32 %v784, %v788
  %792 = vrot.lane.b32.xlu0 %v790, 32
  %v793 = vpop.permute.xlu0 %792
  %v795 = vadd.f32 %v785, %v793
  %v796 = vtanh.pop %v795
  %798 = vrot.lane.b32.xlu0 %v796, 64
  %v799 = vpop.permute.xlu0 %798
  %v801 = vmul.f32 %v784, %v799
  %s802 = scalar_lea.vmem [#allocation2], 48
  %v803 = vld [vmem:[%s802] sm:$0xff]
  %805 = vrot.lane.b32.xlu0 %v801, 32
  %v806 = vpop.permute.xlu0 %805
  %v807 = vsel %vm199, %v806, 0
  %809 = vmatprep.subr.mxu0 0.0
  %810 = vmatpush1.msra.mxu0 %v31
  %811 = vmatprep.subr.mxu0 0.0
  %812 = vmatpush1.msra.mxu0 %v32
  %813 = vmatprep.subr.mxu0 0.0
  %814 = vmatpush1.msra.mxu0 %v33
  %815 = vmatprep.subr.mxu0 0.0
  %816 = vmatpush1.msra.mxu0 %v34
  %817 = vmatprep.subr.mxu0 0.0
  %818 = vmatpush1.msra.mxu0 0.0
  %819 = vmatprep.subr.mxu0 0.0
  %820 = vmatpush1.msra.mxu0 0.0
  %821 = vmatprep.subr.mxu0 0.0
  %822 = vmatpush1.msra.mxu0 0.0
  %823 = vmatprep.subr.mxu0 0.0
  %824 = vmatpush1.msra.mxu0 0.0
  %825 = vmatprep.subr.mxu0 0.0
  %826 = vmatpush1.msra.mxu0 0.0
  %827 = vmatprep.subr.mxu0 0.0
  %828 = vmatpush1.msra.mxu0 0.0
  %829 = vmatprep.subr.mxu0 0.0
  %830 = vmatpush1.msra.mxu0 0.0
  %831 = vmatprep.subr.mxu0 0.0
  %832 = vmatpush1.msra.mxu0 0.0
  %833 = vmatprep.subr.mxu0 0.0
  %834 = vmatpush1.msra.mxu0 0.0
  %835 = vmatprep.subr.mxu0 0.0
  %836 = vmatpush1.msra.mxu0 0.0
  %837 = vmatprep.subr.mxu0 0.0
  %838 = vmatpush1.msra.mxu0 0.0
  %839 = vmatprep.subr.mxu0 0.0
  %840 = vmatpush1.msra.mxu0 0.0
  %841 = vmatprep.subr.mxu0 0.0
  %842 = vmatpush1.msra.mxu0 0.0
  %843 = vmatprep.subr.mxu0 0.0
  %844 = vmatpush1.msra.mxu0 0.0
  %845 = vmatprep.subr.mxu0 0.0
  %846 = vmatpush1.msra.mxu0 0.0
  %847 = vmatprep.subr.mxu0 0.0
  %848 = vmatpush1.msra.mxu0 0.0
  %849 = vmatprep.subr.mxu0 0.0
  %850 = vmatpush1.msra.mxu0 0.0
  %851 = vmatprep.subr.mxu0 0.0
  %852 = vmatpush1.msra.mxu0 0.0
  %853 = vmatprep.subr.mxu0 0.0
  %854 = vmatpush1.msra.mxu0 0.0
  %855 = vmatprep.subr.mxu0 0.0
  %856 = vmatpush1.msra.mxu0 0.0
  %857 = vmatprep.subr.mxu0 0.0
  %858 = vmatpush1.msra.mxu0 0.0
  %859 = vmatprep.subr.mxu0 0.0
  %860 = vmatpush1.msra.mxu0 0.0
  %861 = vmatprep.subr.mxu0 0.0
  %862 = vmatpush1.msra.mxu0 0.0
  %863 = vmatprep.subr.mxu0 0.0
  %864 = vmatpush1.msra.mxu0 0.0
  %865 = vmatprep.subr.mxu0 0.0
  %866 = vmatpush1.msra.mxu0 0.0
  %867 = vmatprep.subr.mxu0 0.0
  %868 = vmatpush1.msra.mxu0 0.0
  %869 = vmatprep.subr.mxu0 0.0
  %870 = vmatpush1.msra.mxu0 0.0
  %871 = vmatprep.subr.mxu0 0.0
  %872 = vmatpush1.msra.mxu0 0.0
  %873 = vmatprep.mubr.f32.mxu0 0.0
  %874 = vmatmul.mubr.f32.gmra.mrb[0].mxu0 %v807
  %v875 = vpop.f32.mrb[0].mxu0
  %v876 = vadd.f32 0.0, %v875
  %v877 = vpop.f32.mrb[0].mxu0
  %878 = vdwg.mxu0
  %v879 = vadd.f32 %v803, %v876
  %v880 = vmul.f32 %v879, 0.5
  %v881 = vsel %vm197, %v879, %v880
  %v882 = vtanh.pop %v881
  %v883 = vmul.f32 %v882, 0.5
  %v884 = vadd.f32 %v883, 0.5
  %v885 = vsel %vm197, %v882, %v884
  %v886 = vmul.f32 %v885, %v795
  %888 = vrot.lane.b32.xlu0 %v885, 64
  %v889 = vpop.permute.xlu0 %888
  %v891 = vmul.f32 %v885, %v889
  %893 = vrot.lane.b32.xlu0 %v891, 32
  %v894 = vpop.permute.xlu0 %893
  %v896 = vadd.f32 %v886, %v894
  %v897 = vtanh.pop %v896
  %899 = vrot.lane.b32.xlu0 %v897, 64
  %v900 = vpop.permute.xlu0 %899
  %v902 = vmul.f32 %v885, %v900
  %s903 = scalar_lea.vmem [#allocation2], 56
  %v904 = vld [vmem:[%s903] sm:$0xff]
  %906 = vrot.lane.b32.xlu0 %v902, 32
  %v907 = vpop.permute.xlu0 %906
  %v908 = vsel %vm199, %v907, 0
  %910 = vmatprep.subr.mxu0 0.0
  %911 = vmatpush1.msra.mxu0 %v31
  %912 = vmatprep.subr.mxu0 0.0
  %913 = vmatpush1.msra.mxu0 %v32
  %914 = vmatprep.subr.mxu0 0.0
  %915 = vmatpush1.msra.mxu0 %v33
  %916 = vmatprep.subr.mxu0 0.0
  %917 = vmatpush1.msra.mxu0 %v34
  %918 = vmatprep.subr.mxu0 0.0
  %919 = vmatpush1.msra.mxu0 0.0
  %920 = vmatprep.subr.mxu0 0.0
  %921 = vmatpush1.msra.mxu0 0.0
  %922 = vmatprep.subr.mxu0 0.0
  %923 = vmatpush1.msra.mxu0 0.0
  %924 = vmatprep.subr.mxu0 0.0
  %925 = vmatpush1.msra.mxu0 0.0
  %926 = vmatprep.subr.mxu0 0.0
  %927 = vmatpush1.msra.mxu0 0.0
  %928 = vmatprep.subr.mxu0 0.0
  %929 = vmatpush1.msra.mxu0 0.0
  %930 = vmatprep.subr.mxu0 0.0
  %931 = vmatpush1.msra.mxu0 0.0
  %932 = vmatprep.subr.mxu0 0.0
  %933 = vmatpush1.msra.mxu0 0.0
  %934 = vmatprep.subr.mxu0 0.0
  %935 = vmatpush1.msra.mxu0 0.0
  %936 = vmatprep.subr.mxu0 0.0
  %937 = vmatpush1.msra.mxu0 0.0
  %938 = vmatprep.subr.mxu0 0.0
  %939 = vmatpush1.msra.mxu0 0.0
  %940 = vmatprep.subr.mxu0 0.0
  %941 = vmatpush1.msra.mxu0 0.0
  %942 = vmatprep.subr.mxu0 0.0
  %943 = vmatpush1.msra.mxu0 0.0
  %944 = vmatprep.subr.mxu0 0.0
  %945 = vmatpush1.msra.mxu0 0.0
  %946 = vmatprep.subr.mxu0 0.0
  %947 = vmatpush1.msra.mxu0 0.0
  %948 = vmatprep.subr.mxu0 0.0
  %949 = vmatpush1.msra.mxu0 0.0
  %950 = vmatprep.subr.mxu0 0.0
  %951 = vmatpush1.msra.mxu0 0.0
  %952 = vmatprep.subr.mxu0 0.0
  %953 = vmatpush1.msra.mxu0 0.0
  %954 = vmatprep.subr.mxu0 0.0
  %955 = vmatpush1.msra.mxu0 0.0
  %956 = vmatprep.subr.mxu0 0.0
  %957 = vmatpush1.msra.mxu0 0.0
  %958 = vmatprep.subr.mxu0 0.0
  %959 = vmatpush1.msra.mxu0 0.0
  %960 = vmatprep.subr.mxu0 0.0
  %961 = vmatpush1.msra.mxu0 0.0
  %962 = vmatprep.subr.mxu0 0.0
  %963 = vmatpush1.msra.mxu0 0.0
  %964 = vmatprep.subr.mxu0 0.0
  %965 = vmatpush1.msra.mxu0 0.0
  %966 = vmatprep.subr.mxu0 0.0
  %967 = vmatpush1.msra.mxu0 0.0
  %968 = vmatprep.subr.mxu0 0.0
  %969 = vmatpush1.msra.mxu0 0.0
  %970 = vmatprep.subr.mxu0 0.0
  %971 = vmatpush1.msra.mxu0 0.0
  %972 = vmatprep.subr.mxu0 0.0
  %973 = vmatpush1.msra.mxu0 0.0
  %974 = vmatprep.mubr.f32.mxu0 0.0
  %975 = vmatmul.mubr.f32.gmra.mrb[0].mxu0 %v908
  %v976 = vpop.f32.mrb[0].mxu0
  %v977 = vadd.f32 0.0, %v976
  %v978 = vpop.f32.mrb[0].mxu0
  %979 = vdwg.mxu0
  %v980 = vadd.f32 %v904, %v977
  %v981 = vmul.f32 %v980, 0.5
  %v982 = vsel %vm197, %v980, %v981
  %v983 = vtanh.pop %v982
  %v984 = vmul.f32 %v983, 0.5
  %v985 = vadd.f32 %v984, 0.5
  %v986 = vsel %vm197, %v983, %v985
  %v987 = vmul.f32 %v986, %v896
  %989 = vrot.lane.b32.xlu0 %v986, 64
  %v990 = vpop.permute.xlu0 %989
  %v992 = vmul.f32 %v986, %v990
  %994 = vrot.lane.b32.xlu0 %v992, 32
  %v995 = vpop.permute.xlu0 %994
  %v997 = vadd.f32 %v987, %v995
  %v998 = vtanh.pop %v997
  %1000 = vrot.lane.b32.xlu0 %v998, 64
  %v1001 = vpop.permute.xlu0 %1000
  %v1003 = vmul.f32 %v986, %v1001
  %v1004 = vmax.f32 %v1003, 0.0
  %v1005 = vld [vmem:[%s4] sm:$0xff]
  %v1006 = vld [vmem:[%s4 + $0x8] sm:$0xff]
  %v1007 = vld [vmem:[%s4 + $0x10] sm:$0xff]
  %v1008 = vld [vmem:[%s4 + $0x18] sm:$0xff]
  %v1009 = vld [vmem:[%s5] sm:$0x1]
  %v1011 = vlaneseq
  %v1012 = vshrl.u32 %v1011, 7
  %v1013 = vsub.s32 0, %v1012
  %v1014 = vrot.slane %v1009, %v1013
  %1017 = vrot.lane.b32.xlu0 %v1004, 32
  %v1018 = vpop.permute.xlu0 %1017
  %v1019 = vsel %vm199, %v1018, 0
  %1021 = vmatprep.subr.mxu0 0.0
  %1022 = vmatpush1.msra.mxu0 %v1005
  %1023 = vmatprep.subr.mxu0 0.0
  %1024 = vmatpush1.msra.mxu0 %v1006
  %1025 = vmatprep.subr.mxu0 0.0
  %1026 = vmatpush1.msra.mxu0 %v1007
  %1027 = vmatprep.subr.mxu0 0.0
  %1028 = vmatpush1.msra.mxu0 %v1008
  %1029 = vmatprep.subr.mxu0 0.0
  %1030 = vmatpush1.msra.mxu0 0.0
  %1031 = vmatprep.subr.mxu0 0.0
  %1032 = vmatpush1.msra.mxu0 0.0
  %1033 = vmatprep.subr.mxu0 0.0
  %1034 = vmatpush1.msra.mxu0 0.0
  %1035 = vmatprep.subr.mxu0 0.0
  %1036 = vmatpush1.msra.mxu0 0.0
  %1037 = vmatprep.subr.mxu0 0.0
  %1038 = vmatpush1.msra.mxu0 0.0
  %1039 = vmatprep.subr.mxu0 0.0
  %1040 = vmatpush1.msra.mxu0 0.0
  %1041 = vmatprep.subr.mxu0 0.0
  %1042 = vmatpush1.msra.mxu0 0.0
  %1043 = vmatprep.subr.mxu0 0.0
  %1044 = vmatpush1.msra.mxu0 0.0
  %1045 = vmatprep.subr.mxu0 0.0
  %1046 = vmatpush1.msra.mxu0 0.0
  %1047 = vmatprep.subr.mxu0 0.0
  %1048 = vmatpush1.msra.mxu0 0.0
  %1049 = vmatprep.subr.mxu0 0.0
  %1050 = vmatpush1.msra.mxu0 0.0
  %1051 = vmatprep.subr.mxu0 0.0
  %1052 = vmatpush1.msra.mxu0 0.0
  %1053 = vmatprep.subr.mxu0 0.0
  %1054 = vmatpush1.msra.mxu0 0.0
  %1055 = vmatprep.subr.mxu0 0.0
  %1056 = vmatpush1.msra.mxu0 0.0
  %1057 = vmatprep.subr.mxu0 0.0
  %1058 = vmatpush1.msra.mxu0 0.0
  %1059 = vmatprep.subr.mxu0 0.0
  %1060 = vmatpush1.msra.mxu0 0.0
  %1061 = vmatprep.subr.mxu0 0.0
  %1062 = vmatpush1.msra.mxu0 0.0
  %1063 = vmatprep.subr.mxu0 0.0
  %1064 = vmatpush1.msra.mxu0 0.0
  %1065 = vmatprep.subr.mxu0 0.0
  %1066 = vmatpush1.msra.mxu0 0.0
  %1067 = vmatprep.subr.mxu0 0.0
  %1068 = vmatpush1.msra.mxu0 0.0
  %1069 = vmatprep.subr.mxu0 0.0
  %1070 = vmatpush1.msra.mxu0 0.0
  %1071 = vmatprep.subr.mxu0 0.0
  %1072 = vmatpush1.msra.mxu0 0.0
  %1073 = vmatprep.subr.mxu0 0.0
  %1074 = vmatpush1.msra.mxu0 0.0
  %1075 = vmatprep.subr.mxu0 0.0
  %1076 = vmatpush1.msra.mxu0 0.0
  %1077 = vmatprep.subr.mxu0 0.0
  %1078 = vmatpush1.msra.mxu0 0.0
  %1079 = vmatprep.subr.mxu0 0.0
  %1080 = vmatpush1.msra.mxu0 0.0
  %1081 = vmatprep.subr.mxu0 0.0
  %1082 = vmatpush1.msra.mxu0 0.0
  %1083 = vmatprep.subr.mxu0 0.0
  %1084 = vmatpush1.msra.mxu0 0.0
  %1085 = vmatprep.mubr.f32.mxu0 0.0
  %1086 = vmatmul.mubr.f32.gmra.mrb[0].mxu0 %v1019
  %v1087 = vpop.f32.mrb[0].mxu0
  %v1088 = vadd.f32 %v1014, %v1087
  %v1089 = vpop.f32.mrb[0].mxu0
  %1090 = vdwg.mxu0
  %v1091 = vmax.f32 %v1088, 0.0
  %v1092 = vld [vmem:[%s6] sm:$0xff]
  %v1093 = vld [vmem:[%s6 + $0x8] sm:$0xff]
  %v1094 = vld [vmem:[%s6 + $0x10] sm:$0xff]
  %v1095 = vld [vmem:[%s6 + $0x18] sm:$0xff]
  %v1096 = vld [vmem:[#allocation3] sm:$0x1]
  %v1098 = vlaneseq
  %v1099 = vshrl.u32 %v1098, 7
  %v1100 = vsub.s32 0, %v1099
  %v1101 = vrot.slane %v1096, %v1100
  %v1104 = vsel %vm199, %v1091, 0
  %1106 = vmatprep.subr.mxu0 0.0
  %1107 = vmatpush1.msra.mxu0 %v1092
  %1108 = vmatprep.subr.mxu0 0.0
  %1109 = vmatpush1.msra.mxu0 %v1093
  %1110 = vmatprep.subr.mxu0 0.0
  %1111 = vmatpush1.msra.mxu0 %v1094
  %1112 = vmatprep.subr.mxu0 0.0
  %1113 = vmatpush1.msra.mxu0 %v1095
  %1114 = vmatprep.subr.mxu0 0.0
  %1115 = vmatpush1.msra.mxu0 0.0
  %1116 = vmatprep.subr.mxu0 0.0
  %1117 = vmatpush1.msra.mxu0 0.0
  %1118 = vmatprep.subr.mxu0 0.0
  %1119 = vmatpush1.msra.mxu0 0.0
  %1120 = vmatprep.subr.mxu0 0.0
  %1121 = vmatpush1.msra.mxu0 0.0
  %1122 = vmatprep.subr.mxu0 0.0
  %1123 = vmatpush1.msra.mxu0 0.0
  %1124 = vmatprep.subr.mxu0 0.0
  %1125 = vmatpush1.msra.mxu0 0.0
  %1126 = vmatprep.subr.mxu0 0.0
  %1127 = vmatpush1.msra.mxu0 0.0
  %1128 = vmatprep.subr.mxu0 0.0
  %1129 = vmatpush1.msra.mxu0 0.0
  %1130 = vmatprep.subr.mxu0 0.0
  %1131 = vmatpush1.msra.mxu0 0.0
  %1132 = vmatprep.subr.mxu0 0.0
  %1133 = vmatpush1.msra.mxu0 0.0
  %1134 = vmatprep.subr.mxu0 0.0
  %1135 = vmatpush1.msra.mxu0 0.0
  %1136 = vmatprep.subr.mxu0 0.0
  %1137 = vmatpush1.msra.mxu0 0.0
  %1138 = vmatprep.subr.mxu0 0.0
  %1139 = vmatpush1.msra.mxu0 0.0
  %1140 = vmatprep.subr.mxu0 0.0
  %1141 = vmatpush1.msra.mxu0 0.0
  %1142 = vmatprep.subr.mxu0 0.0
  %1143 = vmatpush1.msra.mxu0 0.0
  %1144 = vmatprep.subr.mxu0 0.0
  %1145 = vmatpush1.msra.mxu0 0.0
  %1146 = vmatprep.subr.mxu0 0.0
  %1147 = vmatpush1.msra.mxu0 0.0
  %1148 = vmatprep.subr.mxu0 0.0
  %1149 = vmatpush1.msra.mxu0 0.0
  %1150 = vmatprep.subr.mxu0 0.0
  %1151 = vmatpush1.msra.mxu0 0.0
  %1152 = vmatprep.subr.mxu0 0.0
  %1153 = vmatpush1.msra.mxu0 0.0
  %1154 = vmatprep.subr.mxu0 0.0
  %1155 = vmatpush1.msra.mxu0 0.0
  %1156 = vmatprep.subr.mxu0 0.0
  %1157 = vmatpush1.msra.mxu0 0.0
  %1158 = vmatprep.subr.mxu0 0.0
  %1159 = vmatpush1.msra.mxu0 0.0
  %1160 = vmatprep.subr.mxu0 0.0
  %1161 = vmatpush1.msra.mxu0 0.0
  %1162 = vmatprep.subr.mxu0 0.0
  %1163 = vmatpush1.msra.mxu0 0.0
  %1164 = vmatprep.subr.mxu0 0.0
  %1165 = vmatpush1.msra.mxu0 0.0
  %1166 = vmatprep.subr.mxu0 0.0
  %1167 = vmatpush1.msra.mxu0 0.0
  %1168 = vmatprep.subr.mxu0 0.0
  %1169 = vmatpush1.msra.mxu0 0.0
  %1170 = vmatprep.mubr.f32.mxu0 0.0
  %1171 = vmatmul.mubr.f32.gmra.mrb[0].mxu0 %v1104
  %v1172 = vpop.f32.mrb[0].mxu0
  %v1173 = vadd.f32 %v1101, %v1172
  %v1174 = vpop.f32.mrb[0].mxu0
  %1175 = vdwg.mxu0
  %vm1176 = vcmask 7168
  %1177 = vst.msk [vmem:[%s8] sm:$0xff] %vm1176, %v1173
  // Predicated region
  $region34: #{tpu_custom_call.1} parent=0 // pred_check
    _
  $region35: #{tpu_custom_call.1} parent=0 // pred_check_branch
    %1179 = sbr.rel (0) target = $region37
  $region36: #{tpu_custom_call.1} parent=0 // pred_region
    _
  $region37: #{tpu_custom_call.1} parent=0 // pred_fallthru
    _
  // Predicated region
  $region38: #{tpu_custom_call.1} parent=0 // pred_check
    _
  $region39: #{tpu_custom_call.1} parent=0 // pred_check_branch
    %1181 = sbr.rel (0) target = $region41
  $region40: #{tpu_custom_call.1} parent=0 // pred_region
    _
  $region41: #{tpu_custom_call.1} parent=0 // pred_fallthru
    _

</llo_original>
